<compile_context>
chip_gen: v7x
topology: tpu7x:2x2x1
jax: 0.10.0
libtpu: 0.0.40
codegen_flags: <defaults>
</compile_context>

<pallas_src>
import math

import jax
import jax.numpy as jnp
from jax.experimental import pallas as pl
from jax.experimental.pallas import tpu as pltpu

BN_EPS = 1e-5
MATMUL_DTYPE = jnp.bfloat16        # MXU operand dtype (accumulation stays f32)


# ---------------------------------------------------------------------------
# Fused kernel: versatile-conv matmul + BatchNorm (exact batch stats, 2-pass)
#               + ReLU + 2x2/2 max-pool + Linear.
# ---------------------------------------------------------------------------
def _make_fused_kernel(n, h, w, c_in, c_out, ho, wo, num_classes):
    q = ho * wo                     # pooled pixels per image
    m_total = n * h * w             # rows feeding the BatchNorm statistics

    def kernel(x_ref, wc_ref, cb_ref, gamma_ref, beta_ref, wfc_ref, fcb_ref,
               out_ref, sum_ref, ssq_ref):
        p = pl.program_id(0)        # 0: accumulate BN stats, 1: normalize+pool+fc
        b = pl.program_id(1)        # image index

        # ---- in-kernel im2col, grouped by the 4 pooling phases (r, s) ----
        # x_ref block: (4, ho+1, wo+1, c_in); phase (pr, ps) holds
        # xpad[2i+pr, 2j+ps, :].  Row order of `patches` = (r, s, ho, wo),
        # column order = (kh, kw, ci)  -> matches w_comb built in the wrapper.
        phase_blocks = []
        for r in range(2):
            for s in range(2):
                taps = []
                for kh in range(3):
                    for kw in range(3):
                        ar = r + kh
                        ac = s + kw
                        tap = x_ref[(ar % 2) * 2 + (ac % 2),
                                    ar // 2:ar // 2 + ho,
                                    ac // 2:ac // 2 + wo, :]     # (ho, wo, cin)
                        taps.append(tap.reshape(q, c_in))
                phase_blocks.append(jnp.concatenate(taps, axis=1))   # (q, 9*cin)
        patches = jnp.concatenate(phase_blocks, axis=0)              # (4q, 9*cin)

        # ---- single fused MXU matmul (3x3 + centre-1x1 folded) + bias ----
        y = jnp.dot(patches.astype(MATMUL_DTYPE), wc_ref[...],
                    preferred_element_type=jnp.float32)
        y = y + cb_ref[...]                                          # (4q, c_out)

        @pl.when((p == 0) & (b == 0))
        def _init():
            sum_ref[...] = jnp.zeros_like(sum_ref)
            ssq_ref[...] = jnp.zeros_like(ssq_ref)
            out_ref[...] = jnp.zeros_like(out_ref)

        @pl.when(p == 0)
        def _accumulate_stats():
            sum_ref[...] += jnp.sum(y, axis=0, keepdims=True)
            ssq_ref[...] += jnp.sum(y * y, axis=0, keepdims=True)

        @pl.when(p == 1)
        def _normalize_pool_fc():
            inv_m = 1.0 / m_total
            mean = sum_ref[...] * inv_m
            var = ssq_ref[...] * inv_m - mean * mean     # biased var (training BN)
            scale = gamma_ref[...] * jax.lax.rsqrt(var + BN_EPS)
            shift = beta_ref[...] - mean * scale
            yn = jnp.maximum(y * scale + shift, 0.0)     # BN + ReLU  (4q, c_out)

            # 2x2 stride-2 max pool == elementwise max of the 4 contiguous
            # phase blocks (rows stay in (ho, wo) order).
            pooled = jnp.maximum(jnp.maximum(yn[0:q], yn[q:2 * q]),
                                 jnp.maximum(yn[2 * q:3 * q], yn[3 * q:4 * q]))

            # Linear: logits[k] = sum_{q,c} pooled[q,c] * wfc[c,q,k] + bias[k]
            acc = pooled[:, 0:1] * wfc_ref[0]
            for ch in range(1, c_out):
                acc = acc + pooled[:, ch:ch + 1] * wfc_ref[ch]       # (q, K)
            logits = jnp.sum(acc, axis=0, keepdims=True) + fcb_ref[...]
            out_ref[pl.ds(b, 1), :] = logits

    return kernel


# ---------------------------------------------------------------------------
# Full forward (wrapper: layout prep + weight folding + pallas_call)
# ---------------------------------------------------------------------------
def student_net5_forward(x_nchw, params):
    n, c_in, h, w = x_nchw.shape
    assert h % 2 == 0 and w % 2 == 0, "even spatial size (floor == ceil pooling)"
    assert w % 16 == 0, "w/2 multiple of 8 keeps in-kernel reshapes sublane-aligned"
    # TODO(synk): ceil_mode-style partial pooling windows (odd H/W) not handled.

    conv_w = params["conv_w"]                       # (c_out, c_in, 3, 3)
    c_out = conv_w.shape[0]
    ho, wo = h // 2, w // 2
    q = ho * wo

    # --- input: NHWC, zero-pad 1, split into the 4 pooling phases (no 9x im2col) ---
    x_nhwc = jnp.transpose(x_nchw, (0, 2, 3, 1)).astype(jnp.float32)
    xpad = jnp.pad(x_nhwc, ((0, 0), (1, 1), (1, 1), (0, 0)))
    xph = xpad.reshape(n, ho + 1, 2, wo + 1, 2, c_in)
    xph = jnp.transpose(xph, (0, 2, 4, 1, 3, 5))        # (n, 2, 2, ho+1, wo+1, cin)
    xph = xph.reshape(n * 4, ho + 1, wo + 1, c_in)      # phase index = r*2 + s

    # --- fold VConv2d's feature-map combination into ONE conv weight ---
    fm = params["fm"] / jnp.sum(params["fm"])           # weightFeatureMap / sum
    w3 = jnp.transpose(conv_w, (2, 3, 1, 0)).reshape(9 * c_in, c_out)  # rows (kh,kw,ci)
    w1 = jnp.transpose(conv_w[:, :, 1, 1], (1, 0))                     # (ci, co)
    w_comb = fm[0] * w3
    w_comb = w_comb.at[4 * c_in:5 * c_in, :].add(fm[1] * w1)           # centre tap
    w_comb = w_comb.astype(MATMUL_DTYPE)

    conv_b = params["conv_b"].reshape(1, c_out).astype(jnp.float32)
    gamma = params["bn_gamma"].reshape(1, c_out).astype(jnp.float32)
    beta = params["bn_beta"].reshape(1, c_out).astype(jnp.float32)

    # --- Linear weight permuted once to the kernel's (channel, q, class) layout ---
    fc_w = params["fc_w"]                               # (K, c_out*ho*wo), (c,ho,wo) order
    k_cls = fc_w.shape[0]
    w_fc3 = jnp.transpose(fc_w.reshape(k_cls, c_out, q), (1, 2, 0)).astype(jnp.float32)
    fc_b = params["fc_b"].reshape(1, k_cls).astype(jnp.float32)

    kernel = _make_fused_kernel(n, h, w, c_in, c_out, ho, wo, k_cls)

    grid_spec = pltpu.PrefetchScalarGridSpec(
        num_scalar_prefetch=0,
        grid=(2, n),                                    # (pass, image)
        in_specs=[
            # per-image block of the 4 pooling phases (double-buffered by Pallas)
            pl.BlockSpec((4, ho + 1, wo + 1, c_in), lambda p, b: (b, 0, 0, 0)),
            pl.BlockSpec((9 * c_in, c_out), lambda p, b: (0, 0)),     # w_comb (bf16)
            pl.BlockSpec((1, c_out), lambda p, b: (0, 0)),            # conv bias
            pl.BlockSpec((1, c_out), lambda p, b: (0, 0)),            # bn gamma
            pl.BlockSpec((1, c_out), lambda p, b: (0, 0)),            # bn beta
            pl.BlockSpec((c_out, q, k_cls), lambda p, b: (0, 0, 0)),  # fc weight
            pl.BlockSpec((1, k_cls), lambda p, b: (0, 0)),            # fc bias
        ],
        # tiny output kept fully resident (constant block index) -> written once
        out_specs=pl.BlockSpec((n, k_cls), lambda p, b: (0, 0)),
        scratch_shapes=[pltpu.VMEM((1, c_out), jnp.float32),          # sum(y)
                        pltpu.VMEM((1, c_out), jnp.float32)],         # sum(y*y)
    )
    # Both axes "arbitrary": the pass axis orders the two BN passes and the
    # image axis carries the stats accumulator.
    # (v7x note: the image axis could be marked "parallel" once stats are
    #  restructured as per-core partials; kept sequential here for exactness.)
    return pl.pallas_call(
        kernel,
        out_shape=jax.ShapeDtypeStruct((n, k_cls), jnp.float32),
        grid_spec=grid_spec,
        compiler_params=pltpu.CompilerParams(
            dimension_semantics=("arbitrary", "arbitrary"),
            vmem_limit_bytes=32 * 1024 * 1024),
    )(xph, w_comb, conv_b, gamma, beta, w_fc3, fc_b)


# ---------------------------------------------------------------------------
# Pure-XLA reference (same math), used only for the in-script self check.
# ---------------------------------------------------------------------------
def reference_forward(x_nchw, params):
    n, c_in, h, w = x_nchw.shape
    conv_w = params["conv_w"]
    c_out = conv_w.shape[0]
    fm = params["fm"] / jnp.sum(params["fm"])
    bias = params["conv_b"][None, :, None, None]
    dn = ("NCHW", "OIHW", "NCHW")
    y3 = jax.lax.conv_general_dilated(x_nchw, conv_w, (1, 1), ((1, 1), (1, 1)),
                                      dimension_numbers=dn)
    y1 = jax.lax.conv_general_dilated(x_nchw, conv_w[:, :, 1:2, 1:2], (1, 1),
                                      ((0, 0), (0, 0)), dimension_numbers=dn)
    y = fm[0] * (y3 + bias) + fm[1] * (y1 + bias)
    mean = jnp.mean(y, axis=(0, 2, 3), keepdims=True)
    var = jnp.mean(jnp.square(y - mean), axis=(0, 2, 3), keepdims=True)
    y = (y - mean) * jax.lax.rsqrt(var + BN_EPS)
    y = y * params["bn_gamma"][None, :, None, None] + params["bn_beta"][None, :, None, None]
    y = jnp.maximum(y, 0.0)
    ho, wo = h // 2, w // 2
    y = y.reshape(n, c_out, ho, 2, wo, 2).max(axis=(3, 5))
    feat = y.reshape(n, c_out * ho * wo)
    return feat @ params["fc_w"].T + params["fc_b"][None, :]


# ---------------------------------------------------------------------------
# Deterministic parameter init (mirrors Student_net5._initialize_weights)
# ---------------------------------------------------------------------------
def init_params(key, c_in=3, c_out=8, num_classes=8, h=16, w=16):
    k_conv, k_fc = jax.random.split(key, 2)
    ho, wo = h // 2, w // 2

    fan_out = c_out * 3 * 3                   # kaiming_normal, mode='fan_out', relu
    conv_std = math.sqrt(2.0 / fan_out)
    s_num = int(math.ceil(3 / 2))             # = 2
    return {
        "conv_w": conv_std * jax.random.normal(k_conv, (c_out, c_in, 3, 3), jnp.float32),
        "conv_b": jnp.zeros((c_out,), jnp.float32),
        "fm": jnp.full((s_num,), 1.0 / s_num, jnp.float32),   # weightFeatureMap
        "bn_gamma": jnp.ones((c_out,), jnp.float32),
        "bn_beta": jnp.zeros((c_out,), jnp.float32),
        "fc_w": 0.01 * jax.random.normal(k_fc, (num_classes, c_out * ho * wo), jnp.float32),
        "fc_b": jnp.zeros((num_classes,), jnp.float32),
    }


if __name__ == "__main__":
    key = jax.random.PRNGKey(0)
    k_params, k_x = jax.random.split(key)

    N, C_IN, H, W = 2, 3, 16, 16          # small image, one conv block
    NUM_CLASSES = 8

    params = init_params(k_params, c_in=C_IN, c_out=8, num_classes=NUM_CLASSES, h=H, w=W)
    x = jax.random.normal(k_x, (N, C_IN, H, W), jnp.float32)   # NCHW like PyTorch

    fwd = jax.jit(student_net5_forward)
    logits = jax.block_until_ready(fwd(x, params))

    assert logits.shape == (N, NUM_CLASSES), logits.shape
    assert bool(jnp.all(jnp.isfinite(logits)))

    # self-check against a pure-XLA reference (loose tol: bf16 MXU operands)
    ref = jax.block_until_ready(reference_forward(x, params))
    max_err = float(jnp.max(jnp.abs(logits - ref)))
    assert bool(jnp.allclose(logits, ref, atol=5e-2, rtol=5e-2)), max_err

    print("KERNEL_OK")
</pallas_src>

<mosaic_0001>
module attributes {stable_mosaic.version = 11 : i64} {
  func.func @kernel(%arg0: i32, %arg1: i32, %arg2: memref<4x9x9x3xf32, #tpu.memory_space<vmem>>, %arg3: memref<27x8xbf16, #tpu.memory_space<vmem>>, %arg4: memref<1x8xf32, #tpu.memory_space<vmem>>, %arg5: memref<1x8xf32, #tpu.memory_space<vmem>>, %arg6: memref<1x8xf32, #tpu.memory_space<vmem>>, %arg7: memref<8x64x8xf32, #tpu.memory_space<vmem>>, %arg8: memref<1x8xf32, #tpu.memory_space<vmem>>, %arg9: memref<2x8xf32, #tpu.memory_space<vmem>>, %arg10: memref<1x8xf32, #tpu.memory_space<vmem>>, %arg11: memref<1x8xf32, #tpu.memory_space<vmem>>) attributes {dimension_semantics = [#tpu.dimension_semantics<arbitrary>, #tpu.dimension_semantics<arbitrary>], iteration_bounds = array<i64: 2, 2>, scalar_prefetch = 0 : i64, scratch_operands = 2 : i64, tpu.core_type = #tpu.core_type<tc>, window_params = [{transform_indices = @transform_0, window_bounds = array<i64: 4, 9, 9, 3>}, {pipeline_mode = #tpu.pipeline_mode<synchronous>, transform_indices = @transform_1, window_bounds = array<i64: 27, 8>}, {pipeline_mode = #tpu.pipeline_mode<synchronous>, transform_indices = @transform_2, window_bounds = array<i64: 1, 8>}, {pipeline_mode = #tpu.pipeline_mode<synchronous>, transform_indices = @transform_3, window_bounds = array<i64: 1, 8>}, {pipeline_mode = #tpu.pipeline_mode<synchronous>, transform_indices = @transform_4, window_bounds = array<i64: 1, 8>}, {pipeline_mode = #tpu.pipeline_mode<synchronous>, transform_indices = @transform_5, window_bounds = array<i64: 8, 64, 8>}, {pipeline_mode = #tpu.pipeline_mode<synchronous>, transform_indices = @transform_6, window_bounds = array<i64: 1, 8>}, {pipeline_mode = #tpu.pipeline_mode<synchronous>, transform_indices = @transform_7, window_bounds = array<i64: 2, 8>}]} {
    %c0 = arith.constant 0 : index
    %c0_0 = arith.constant 0 : index
    %c0_1 = arith.constant 0 : index
    %c0_2 = arith.constant 0 : index
    %0 = vector.load %arg2[%c0, %c0_0, %c0_1, %c0_2] : memref<4x9x9x3xf32, #tpu.memory_space<vmem>>, vector<1x8x8x3xf32>
    %1 = vector.shape_cast %0 : vector<1x8x8x3xf32> to vector<8x8x3xf32>
    %2 = vector.shape_cast %1 : vector<8x8x3xf32> to vector<64x3xf32>
    %c1 = arith.constant 1 : index
    %c0_3 = arith.constant 0 : index
    %c0_4 = arith.constant 0 : index
    %c0_5 = arith.constant 0 : index
    %3 = vector.load %arg2[%c1, %c0_3, %c0_4, %c0_5] : memref<4x9x9x3xf32, #tpu.memory_space<vmem>>, vector<1x8x8x3xf32>
    %4 = vector.shape_cast %3 : vector<1x8x8x3xf32> to vector<8x8x3xf32>
    %5 = vector.shape_cast %4 : vector<8x8x3xf32> to vector<64x3xf32>
    %c0_6 = arith.constant 0 : index
    %c0_7 = arith.constant 0 : index
    %c1_8 = arith.constant 1 : index
    %c0_9 = arith.constant 0 : index
    %6 = vector.load %arg2[%c0_6, %c0_7, %c1_8, %c0_9] : memref<4x9x9x3xf32, #tpu.memory_space<vmem>>, vector<1x8x8x3xf32>
    %7 = vector.shape_cast %6 : vector<1x8x8x3xf32> to vector<8x8x3xf32>
    %8 = vector.shape_cast %7 : vector<8x8x3xf32> to vector<64x3xf32>
    %c2 = arith.constant 2 : index
    %c0_10 = arith.constant 0 : index
    %c0_11 = arith.constant 0 : index
    %c0_12 = arith.constant 0 : index
    %9 = vector.load %arg2[%c2, %c0_10, %c0_11, %c0_12] : memref<4x9x9x3xf32, #tpu.memory_space<vmem>>, vector<1x8x8x3xf32>
    %10 = vector.shape_cast %9 : vector<1x8x8x3xf32> to vector<8x8x3xf32>
    %11 = vector.shape_cast %10 : vector<8x8x3xf32> to vector<64x3xf32>
    %c3 = arith.constant 3 : index
    %c0_13 = arith.constant 0 : index
    %c0_14 = arith.constant 0 : index
    %c0_15 = arith.constant 0 : index
    %12 = vector.load %arg2[%c3, %c0_13, %c0_14, %c0_15] : memref<4x9x9x3xf32, #tpu.memory_space<vmem>>, vector<1x8x8x3xf32>
    %13 = vector.shape_cast %12 : vector<1x8x8x3xf32> to vector<8x8x3xf32>
    %14 = vector.shape_cast %13 : vector<8x8x3xf32> to vector<64x3xf32>
    %c2_16 = arith.constant 2 : index
    %c0_17 = arith.constant 0 : index
    %c1_18 = arith.constant 1 : index
    %c0_19 = arith.constant 0 : index
    %15 = vector.load %arg2[%c2_16, %c0_17, %c1_18, %c0_19] : memref<4x9x9x3xf32, #tpu.memory_space<vmem>>, vector<1x8x8x3xf32>
    %16 = vector.shape_cast %15 : vector<1x8x8x3xf32> to vector<8x8x3xf32>
    %17 = vector.shape_cast %16 : vector<8x8x3xf32> to vector<64x3xf32>
    %c0_20 = arith.constant 0 : index
    %c1_21 = arith.constant 1 : index
    %c0_22 = arith.constant 0 : index
    %c0_23 = arith.constant 0 : index
    %18 = vector.load %arg2[%c0_20, %c1_21, %c0_22, %c0_23] : memref<4x9x9x3xf32, #tpu.memory_space<vmem>>, vector<1x8x8x3xf32>
    %19 = vector.shape_cast %18 : vector<1x8x8x3xf32> to vector<8x8x3xf32>
    %20 = vector.shape_cast %19 : vector<8x8x3xf32> to vector<64x3xf32>
    %c1_24 = arith.constant 1 : index
    %c1_25 = arith.constant 1 : index
    %c0_26 = arith.constant 0 : index
    %c0_27 = arith.constant 0 : index
    %21 = vector.load %arg2[%c1_24, %c1_25, %c0_26, %c0_27] : memref<4x9x9x3xf32, #tpu.memory_space<vmem>>, vector<1x8x8x3xf32>
    %22 = vector.shape_cast %21 : vector<1x8x8x3xf32> to vector<8x8x3xf32>
    %23 = vector.shape_cast %22 : vector<8x8x3xf32> to vector<64x3xf32>
    %c0_28 = arith.constant 0 : index
    %c1_29 = arith.constant 1 : index
    %c1_30 = arith.constant 1 : index
    %c0_31 = arith.constant 0 : index
    %24 = vector.load %arg2[%c0_28, %c1_29, %c1_30, %c0_31] : memref<4x9x9x3xf32, #tpu.memory_space<vmem>>, vector<1x8x8x3xf32>
    %25 = vector.shape_cast %24 : vector<1x8x8x3xf32> to vector<8x8x3xf32>
    %26 = vector.shape_cast %25 : vector<8x8x3xf32> to vector<64x3xf32>
    %27 = tpu.concatenate %2, %5, %8, %11, %14, %17, %20, %23, %26 in 1 : vector<64x3xf32>, vector<64x3xf32>, vector<64x3xf32>, vector<64x3xf32>, vector<64x3xf32>, vector<64x3xf32>, vector<64x3xf32>, vector<64x3xf32>, vector<64x3xf32> -> vector<64x27xf32>
    %c1_32 = arith.constant 1 : index
    %c0_33 = arith.constant 0 : index
    %c0_34 = arith.constant 0 : index
    %c0_35 = arith.constant 0 : index
    %28 = vector.load %arg2[%c1_32, %c0_33, %c0_34, %c0_35] : memref<4x9x9x3xf32, #tpu.memory_space<vmem>>, vector<1x8x8x3xf32>
    %29 = vector.shape_cast %28 : vector<1x8x8x3xf32> to vector<8x8x3xf32>
    %30 = vector.shape_cast %29 : vector<8x8x3xf32> to vector<64x3xf32>
    %c0_36 = arith.constant 0 : index
    %c0_37 = arith.constant 0 : index
    %c1_38 = arith.constant 1 : index
    %c0_39 = arith.constant 0 : index
    %31 = vector.load %arg2[%c0_36, %c0_37, %c1_38, %c0_39] : memref<4x9x9x3xf32, #tpu.memory_space<vmem>>, vector<1x8x8x3xf32>
    %32 = vector.shape_cast %31 : vector<1x8x8x3xf32> to vector<8x8x3xf32>
    %33 = vector.shape_cast %32 : vector<8x8x3xf32> to vector<64x3xf32>
    %c1_40 = arith.constant 1 : index
    %c0_41 = arith.constant 0 : index
    %c1_42 = arith.constant 1 : index
    %c0_43 = arith.constant 0 : index
    %34 = vector.load %arg2[%c1_40, %c0_41, %c1_42, %c0_43] : memref<4x9x9x3xf32, #tpu.memory_space<vmem>>, vector<1x8x8x3xf32>
    %35 = vector.shape_cast %34 : vector<1x8x8x3xf32> to vector<8x8x3xf32>
    %36 = vector.shape_cast %35 : vector<8x8x3xf32> to vector<64x3xf32>
    %c3_44 = arith.constant 3 : index
    %c0_45 = arith.constant 0 : index
    %c0_46 = arith.constant 0 : index
    %c0_47 = arith.constant 0 : index
    %37 = vector.load %arg2[%c3_44, %c0_45, %c0_46, %c0_47] : memref<4x9x9x3xf32, #tpu.memory_space<vmem>>, vector<1x8x8x3xf32>
    %38 = vector.shape_cast %37 : vector<1x8x8x3xf32> to vector<8x8x3xf32>
    %39 = vector.shape_cast %38 : vector<8x8x3xf32> to vector<64x3xf32>
    %c2_48 = arith.constant 2 : index
    %c0_49 = arith.constant 0 : index
    %c1_50 = arith.constant 1 : index
    %c0_51 = arith.constant 0 : index
    %40 = vector.load %arg2[%c2_48, %c0_49, %c1_50, %c0_51] : memref<4x9x9x3xf32, #tpu.memory_space<vmem>>, vector<1x8x8x3xf32>
    %41 = vector.shape_cast %40 : vector<1x8x8x3xf32> to vector<8x8x3xf32>
    %42 = vector.shape_cast %41 : vector<8x8x3xf32> to vector<64x3xf32>
    %c3_52 = arith.constant 3 : index
    %c0_53 = arith.constant 0 : index
    %c1_54 = arith.constant 1 : index
    %c0_55 = arith.constant 0 : index
    %43 = vector.load %arg2[%c3_52, %c0_53, %c1_54, %c0_55] : memref<4x9x9x3xf32, #tpu.memory_space<vmem>>, vector<1x8x8x3xf32>
    %44 = vector.shape_cast %43 : vector<1x8x8x3xf32> to vector<8x8x3xf32>
    %45 = vector.shape_cast %44 : vector<8x8x3xf32> to vector<64x3xf32>
    %c1_56 = arith.constant 1 : index
    %c1_57 = arith.constant 1 : index
    %c0_58 = arith.constant 0 : index
    %c0_59 = arith.constant 0 : index
    %46 = vector.load %arg2[%c1_56, %c1_57, %c0_58, %c0_59] : memref<4x9x9x3xf32, #tpu.memory_space<vmem>>, vector<1x8x8x3xf32>
    %47 = vector.shape_cast %46 : vector<1x8x8x3xf32> to vector<8x8x3xf32>
    %48 = vector.shape_cast %47 : vector<8x8x3xf32> to vector<64x3xf32>
    %c0_60 = arith.constant 0 : index
    %c1_61 = arith.constant 1 : index
    %c1_62 = arith.constant 1 : index
    %c0_63 = arith.constant 0 : index
    %49 = vector.load %arg2[%c0_60, %c1_61, %c1_62, %c0_63] : memref<4x9x9x3xf32, #tpu.memory_space<vmem>>, vector<1x8x8x3xf32>
    %50 = vector.shape_cast %49 : vector<1x8x8x3xf32> to vector<8x8x3xf32>
    %51 = vector.shape_cast %50 : vector<8x8x3xf32> to vector<64x3xf32>
    %c1_64 = arith.constant 1 : index
    %c1_65 = arith.constant 1 : index
    %c1_66 = arith.constant 1 : index
    %c0_67 = arith.constant 0 : index
    %52 = vector.load %arg2[%c1_64, %c1_65, %c1_66, %c0_67] : memref<4x9x9x3xf32, #tpu.memory_space<vmem>>, vector<1x8x8x3xf32>
    %53 = vector.shape_cast %52 : vector<1x8x8x3xf32> to vector<8x8x3xf32>
    %54 = vector.shape_cast %53 : vector<8x8x3xf32> to vector<64x3xf32>
    %55 = tpu.concatenate %30, %33, %36, %39, %42, %45, %48, %51, %54 in 1 : vector<64x3xf32>, vector<64x3xf32>, vector<64x3xf32>, vector<64x3xf32>, vector<64x3xf32>, vector<64x3xf32>, vector<64x3xf32>, vector<64x3xf32>, vector<64x3xf32> -> vector<64x27xf32>
    %c2_68 = arith.constant 2 : index
    %c0_69 = arith.constant 0 : index
    %c0_70 = arith.constant 0 : index
    %c0_71 = arith.constant 0 : index
    %56 = vector.load %arg2[%c2_68, %c0_69, %c0_70, %c0_71] : memref<4x9x9x3xf32, #tpu.memory_space<vmem>>, vector<1x8x8x3xf32>
    %57 = vector.shape_cast %56 : vector<1x8x8x3xf32> to vector<8x8x3xf32>
    %58 = vector.shape_cast %57 : vector<8x8x3xf32> to vector<64x3xf32>
    %c3_72 = arith.constant 3 : index
    %c0_73 = arith.constant 0 : index
    %c0_74 = arith.constant 0 : index
    %c0_75 = arith.constant 0 : index
    %59 = vector.load %arg2[%c3_72, %c0_73, %c0_74, %c0_75] : memref<4x9x9x3xf32, #tpu.memory_space<vmem>>, vector<1x8x8x3xf32>
    %60 = vector.shape_cast %59 : vector<1x8x8x3xf32> to vector<8x8x3xf32>
    %61 = vector.shape_cast %60 : vector<8x8x3xf32> to vector<64x3xf32>
    %c2_76 = arith.constant 2 : index
    %c0_77 = arith.constant 0 : index
    %c1_78 = arith.constant 1 : index
    %c0_79 = arith.constant 0 : index
    %62 = vector.load %arg2[%c2_76, %c0_77, %c1_78, %c0_79] : memref<4x9x9x3xf32, #tpu.memory_space<vmem>>, vector<1x8x8x3xf32>
    %63 = vector.shape_cast %62 : vector<1x8x8x3xf32> to vector<8x8x3xf32>
    %64 = vector.shape_cast %63 : vector<8x8x3xf32> to vector<64x3xf32>
    %c0_80 = arith.constant 0 : index
    %c1_81 = arith.constant 1 : index
    %c0_82 = arith.constant 0 : index
    %c0_83 = arith.constant 0 : index
    %65 = vector.load %arg2[%c0_80, %c1_81, %c0_82, %c0_83] : memref<4x9x9x3xf32, #tpu.memory_space<vmem>>, vector<1x8x8x3xf32>
    %66 = vector.shape_cast %65 : vector<1x8x8x3xf32> to vector<8x8x3xf32>
    %67 = vector.shape_cast %66 : vector<8x8x3xf32> to vector<64x3xf32>
    %c1_84 = arith.constant 1 : index
    %c1_85 = arith.constant 1 : index
    %c0_86 = arith.constant 0 : index
    %c0_87 = arith.constant 0 : index
    %68 = vector.load %arg2[%c1_84, %c1_85, %c0_86, %c0_87] : memref<4x9x9x3xf32, #tpu.memory_space<vmem>>, vector<1x8x8x3xf32>
    %69 = vector.shape_cast %68 : vector<1x8x8x3xf32> to vector<8x8x3xf32>
    %70 = vector.shape_cast %69 : vector<8x8x3xf32> to vector<64x3xf32>
    %c0_88 = arith.constant 0 : index
    %c1_89 = arith.constant 1 : index
    %c1_90 = arith.constant 1 : index
    %c0_91 = arith.constant 0 : index
    %71 = vector.load %arg2[%c0_88, %c1_89, %c1_90, %c0_91] : memref<4x9x9x3xf32, #tpu.memory_space<vmem>>, vector<1x8x8x3xf32>
    %72 = vector.shape_cast %71 : vector<1x8x8x3xf32> to vector<8x8x3xf32>
    %73 = vector.shape_cast %72 : vector<8x8x3xf32> to vector<64x3xf32>
    %c2_92 = arith.constant 2 : index
    %c1_93 = arith.constant 1 : index
    %c0_94 = arith.constant 0 : index
    %c0_95 = arith.constant 0 : index
    %74 = vector.load %arg2[%c2_92, %c1_93, %c0_94, %c0_95] : memref<4x9x9x3xf32, #tpu.memory_space<vmem>>, vector<1x8x8x3xf32>
    %75 = vector.shape_cast %74 : vector<1x8x8x3xf32> to vector<8x8x3xf32>
    %76 = vector.shape_cast %75 : vector<8x8x3xf32> to vector<64x3xf32>
    %c3_96 = arith.constant 3 : index
    %c1_97 = arith.constant 1 : index
    %c0_98 = arith.constant 0 : index
    %c0_99 = arith.constant 0 : index
    %77 = vector.load %arg2[%c3_96, %c1_97, %c0_98, %c0_99] : memref<4x9x9x3xf32, #tpu.memory_space<vmem>>, vector<1x8x8x3xf32>
    %78 = vector.shape_cast %77 : vector<1x8x8x3xf32> to vector<8x8x3xf32>
    %79 = vector.shape_cast %78 : vector<8x8x3xf32> to vector<64x3xf32>
    %c2_100 = arith.constant 2 : index
    %c1_101 = arith.constant 1 : index
    %c1_102 = arith.constant 1 : index
    %c0_103 = arith.constant 0 : index
    %80 = vector.load %arg2[%c2_100, %c1_101, %c1_102, %c0_103] : memref<4x9x9x3xf32, #tpu.memory_space<vmem>>, vector<1x8x8x3xf32>
    %81 = vector.shape_cast %80 : vector<1x8x8x3xf32> to vector<8x8x3xf32>
    %82 = vector.shape_cast %81 : vector<8x8x3xf32> to vector<64x3xf32>
    %83 = tpu.concatenate %58, %61, %64, %67, %70, %73, %76, %79, %82 in 1 : vector<64x3xf32>, vector<64x3xf32>, vector<64x3xf32>, vector<64x3xf32>, vector<64x3xf32>, vector<64x3xf32>, vector<64x3xf32>, vector<64x3xf32>, vector<64x3xf32> -> vector<64x27xf32>
    %c3_104 = arith.constant 3 : index
    %c0_105 = arith.constant 0 : index
    %c0_106 = arith.constant 0 : index
    %c0_107 = arith.constant 0 : index
    %84 = vector.load %arg2[%c3_104, %c0_105, %c0_106, %c0_107] : memref<4x9x9x3xf32, #tpu.memory_space<vmem>>, vector<1x8x8x3xf32>
    %85 = vector.shape_cast %84 : vector<1x8x8x3xf32> to vector<8x8x3xf32>
    %86 = vector.shape_cast %85 : vector<8x8x3xf32> to vector<64x3xf32>
    %c2_108 = arith.constant 2 : index
    %c0_109 = arith.constant 0 : index
    %c1_110 = arith.constant 1 : index
    %c0_111 = arith.constant 0 : index
    %87 = vector.load %arg2[%c2_108, %c0_109, %c1_110, %c0_111] : memref<4x9x9x3xf32, #tpu.memory_space<vmem>>, vector<1x8x8x3xf32>
    %88 = vector.shape_cast %87 : vector<1x8x8x3xf32> to vector<8x8x3xf32>
    %89 = vector.shape_cast %88 : vector<8x8x3xf32> to vector<64x3xf32>
    %c3_112 = arith.constant 3 : index
    %c0_113 = arith.constant 0 : index
    %c1_114 = arith.constant 1 : index
    %c0_115 = arith.constant 0 : index
    %90 = vector.load %arg2[%c3_112, %c0_113, %c1_114, %c0_115] : memref<4x9x9x3xf32, #tpu.memory_space<vmem>>, vector<1x8x8x3xf32>
    %91 = vector.shape_cast %90 : vector<1x8x8x3xf32> to vector<8x8x3xf32>
    %92 = vector.shape_cast %91 : vector<8x8x3xf32> to vector<64x3xf32>
    %c1_116 = arith.constant 1 : index
    %c1_117 = arith.constant 1 : index
    %c0_118 = arith.constant 0 : index
    %c0_119 = arith.constant 0 : index
    %93 = vector.load %arg2[%c1_116, %c1_117, %c0_118, %c0_119] : memref<4x9x9x3xf32, #tpu.memory_space<vmem>>, vector<1x8x8x3xf32>
    %94 = vector.shape_cast %93 : vector<1x8x8x3xf32> to vector<8x8x3xf32>
    %95 = vector.shape_cast %94 : vector<8x8x3xf32> to vector<64x3xf32>
    %c0_120 = arith.constant 0 : index
    %c1_121 = arith.constant 1 : index
    %c1_122 = arith.constant 1 : index
    %c0_123 = arith.constant 0 : index
    %96 = vector.load %arg2[%c0_120, %c1_121, %c1_122, %c0_123] : memref<4x9x9x3xf32, #tpu.memory_space<vmem>>, vector<1x8x8x3xf32>
    %97 = vector.shape_cast %96 : vector<1x8x8x3xf32> to vector<8x8x3xf32>
    %98 = vector.shape_cast %97 : vector<8x8x3xf32> to vector<64x3xf32>
    %c1_124 = arith.constant 1 : index
    %c1_125 = arith.constant 1 : index
    %c1_126 = arith.constant 1 : index
    %c0_127 = arith.constant 0 : index
    %99 = vector.load %arg2[%c1_124, %c1_125, %c1_126, %c0_127] : memref<4x9x9x3xf32, #tpu.memory_space<vmem>>, vector<1x8x8x3xf32>
    %100 = vector.shape_cast %99 : vector<1x8x8x3xf32> to vector<8x8x3xf32>
    %101 = vector.shape_cast %100 : vector<8x8x3xf32> to vector<64x3xf32>
    %c3_128 = arith.constant 3 : index
    %c1_129 = arith.constant 1 : index
    %c0_130 = arith.constant 0 : index
    %c0_131 = arith.constant 0 : index
    %102 = vector.load %arg2[%c3_128, %c1_129, %c0_130, %c0_131] : memref<4x9x9x3xf32, #tpu.memory_space<vmem>>, vector<1x8x8x3xf32>
    %103 = vector.shape_cast %102 : vector<1x8x8x3xf32> to vector<8x8x3xf32>
    %104 = vector.shape_cast %103 : vector<8x8x3xf32> to vector<64x3xf32>
    %c2_132 = arith.constant 2 : index
    %c1_133 = arith.constant 1 : index
    %c1_134 = arith.constant 1 : index
    %c0_135 = arith.constant 0 : index
    %105 = vector.load %arg2[%c2_132, %c1_133, %c1_134, %c0_135] : memref<4x9x9x3xf32, #tpu.memory_space<vmem>>, vector<1x8x8x3xf32>
    %106 = vector.shape_cast %105 : vector<1x8x8x3xf32> to vector<8x8x3xf32>
    %107 = vector.shape_cast %106 : vector<8x8x3xf32> to vector<64x3xf32>
    %c3_136 = arith.constant 3 : index
    %c1_137 = arith.constant 1 : index
    %c1_138 = arith.constant 1 : index
    %c0_139 = arith.constant 0 : index
    %108 = vector.load %arg2[%c3_136, %c1_137, %c1_138, %c0_139] : memref<4x9x9x3xf32, #tpu.memory_space<vmem>>, vector<1x8x8x3xf32>
    %109 = vector.shape_cast %108 : vector<1x8x8x3xf32> to vector<8x8x3xf32>
    %110 = vector.shape_cast %109 : vector<8x8x3xf32> to vector<64x3xf32>
    %111 = tpu.concatenate %86, %89, %92, %95, %98, %101, %104, %107, %110 in 1 : vector<64x3xf32>, vector<64x3xf32>, vector<64x3xf32>, vector<64x3xf32>, vector<64x3xf32>, vector<64x3xf32>, vector<64x3xf32>, vector<64x3xf32>, vector<64x3xf32> -> vector<64x27xf32>
    %112 = tpu.concatenate %27, %55, %83, %111 in 0 : vector<64x27xf32>, vector<64x27xf32>, vector<64x27xf32>, vector<64x27xf32> -> vector<256x27xf32>
    %113 = arith.truncf %112 : vector<256x27xf32> to vector<256x27xbf16>
    %c0_140 = arith.constant 0 : index
    %c0_141 = arith.constant 0 : index
    %114 = vector.load %arg3[%c0_140, %c0_141] : memref<27x8xbf16, #tpu.memory_space<vmem>>, vector<27x8xbf16>
    %cst = arith.constant dense<0.000000e+00> : vector<256x8xf32>
    %115 = tpu.matmul %113, %114, %cst {dimension_numbers = #tpu.dot_dimension_numbers<[1], [0], [0], [1], [0, 0, 1, 1], [], []>} : vector<256x27xbf16>, vector<27x8xbf16>, vector<256x8xf32> -> vector<256x8xf32>
    %c0_142 = arith.constant 0 : index
    %c0_143 = arith.constant 0 : index
    %116 = vector.load %arg4[%c0_142, %c0_143] : memref<1x8xf32, #tpu.memory_space<vmem>>, vector<1x8xf32>
    %117 = vector.broadcast %116 : vector<1x8xf32> to vector<256x8xf32>
    %118 = arith.addf %115, %117 : vector<256x8xf32>
    %c0_i32 = arith.constant 0 : i32
    %119 = arith.cmpi eq, %arg0, %c0_i32 : i32
    %c0_i32_144 = arith.constant 0 : i32
    %120 = arith.cmpi eq, %arg1, %c0_i32_144 : i32
    %121 = arith.andi %119, %120 : i1
    %122 = arith.extui %121 : i1 to i32
    %c0_i32_145 = arith.constant 0 : i32
    %123 = arith.cmpi ne, %122, %c0_i32_145 : i32
    scf.if %123 {
      %cst_149 = arith.constant 0.000000e+00 : f32
      %130 = vector.broadcast %cst_149 : f32 to vector<1x8xf32>
      %c0_150 = arith.constant 0 : index
      %c0_151 = arith.constant 0 : index
      %131 = vector.load %arg10[%c0_150, %c0_151] : memref<1x8xf32, #tpu.memory_space<vmem>>, vector<1x8xf32>
      tpu.vector_store %arg10[%c0_150, %c0_151], %130 {strides = array<i32>} : memref<1x8xf32, #tpu.memory_space<vmem>>, vector<1x8xf32>,
      %cst_152 = arith.constant 0.000000e+00 : f32
      %132 = vector.broadcast %cst_152 : f32 to vector<1x8xf32>
      %c0_153 = arith.constant 0 : index
      %c0_154 = arith.constant 0 : index
      %133 = vector.load %arg11[%c0_153, %c0_154] : memref<1x8xf32, #tpu.memory_space<vmem>>, vector<1x8xf32>
      tpu.vector_store %arg11[%c0_153, %c0_154], %132 {strides = array<i32>} : memref<1x8xf32, #tpu.memory_space<vmem>>, vector<1x8xf32>,
      %cst_155 = arith.constant 0.000000e+00 : f32
      %134 = vector.broadcast %cst_155 : f32 to vector<2x8xf32>
      %c0_156 = arith.constant 0 : index
      %c0_157 = arith.constant 0 : index
      %135 = vector.load %arg9[%c0_156, %c0_157] : memref<2x8xf32, #tpu.memory_space<vmem>>, vector<2x8xf32>
      tpu.vector_store %arg9[%c0_156, %c0_157], %134 {strides = array<i32>} : memref<2x8xf32, #tpu.memory_space<vmem>>, vector<2x8xf32>,
    } else {
    }
    %c0_i32_146 = arith.constant 0 : i32
    %124 = arith.cmpi eq, %arg0, %c0_i32_146 : i32
    %125 = arith.extui %124 : i1 to i32
    %c0_i32_147 = arith.constant 0 : i32
    %126 = arith.cmpi ne, %125, %c0_i32_147 : i32
    scf.if %126 {
      %c0_149 = arith.constant 0 : index
      %c0_150 = arith.constant 0 : index
      %130 = vector.load %arg10[%c0_149, %c0_150] : memref<1x8xf32, #tpu.memory_space<vmem>>, vector<1x8xf32>
      %cst_151 = arith.constant dense<0.000000e+00> : vector<8xf32>
      %131 = vector.multi_reduction <add>, %118, %cst_151 [0] : vector<256x8xf32> to vector<8xf32>
      %132 = vector.shape_cast %131 : vector<8xf32> to vector<1x8xf32>
      %133 = arith.addf %130, %132 : vector<1x8xf32>
      %c0_152 = arith.constant 0 : index
      %c0_153 = arith.constant 0 : index
      %134 = vector.load %arg10[%c0_152, %c0_153] : memref<1x8xf32, #tpu.memory_space<vmem>>, vector<1x8xf32>
      tpu.vector_store %arg10[%c0_152, %c0_153], %133 {strides = array<i32>} : memref<1x8xf32, #tpu.memory_space<vmem>>, vector<1x8xf32>,
      %c0_154 = arith.constant 0 : index
      %c0_155 = arith.constant 0 : index
      %135 = vector.load %arg11[%c0_154, %c0_155] : memref<1x8xf32, #tpu.memory_space<vmem>>, vector<1x8xf32>
      %136 = arith.mulf %118, %118 : vector<256x8xf32>
      %cst_156 = arith.constant dense<0.000000e+00> : vector<8xf32>
      %137 = vector.multi_reduction <add>, %136, %cst_156 [0] : vector<256x8xf32> to vector<8xf32>
      %138 = vector.shape_cast %137 : vector<8xf32> to vector<1x8xf32>
      %139 = arith.addf %135, %138 : vector<1x8xf32>
      %c0_157 = arith.constant 0 : index
      %c0_158 = arith.constant 0 : index
      %140 = vector.load %arg11[%c0_157, %c0_158] : memref<1x8xf32, #tpu.memory_space<vmem>>, vector<1x8xf32>
      tpu.vector_store %arg11[%c0_157, %c0_158], %139 {strides = array<i32>} : memref<1x8xf32, #tpu.memory_space<vmem>>, vector<1x8xf32>,
    } else {
    }
    %c1_i32 = arith.constant 1 : i32
    %127 = arith.cmpi eq, %arg0, %c1_i32 : i32
    %128 = arith.extui %127 : i1 to i32
    %c0_i32_148 = arith.constant 0 : i32
    %129 = arith.cmpi ne, %128, %c0_i32_148 : i32
    scf.if %129 {
      %c0_149 = arith.constant 0 : index
      %c0_150 = arith.constant 0 : index
      %130 = vector.load %arg10[%c0_149, %c0_150] : memref<1x8xf32, #tpu.memory_space<vmem>>, vector<1x8xf32>
      %cst_151 = arith.constant 0.001953125 : f32
      %131 = vector.broadcast %cst_151 : f32 to vector<1x8xf32>
      %132 = arith.mulf %130, %131 : vector<1x8xf32>
      %c0_152 = arith.constant 0 : index
      %c0_153 = arith.constant 0 : index
      %133 = vector.load %arg11[%c0_152, %c0_153] : memref<1x8xf32, #tpu.memory_space<vmem>>, vector<1x8xf32>
      %cst_154 = arith.constant 0.001953125 : f32
      %134 = vector.broadcast %cst_154 : f32 to vector<1x8xf32>
      %135 = arith.mulf %133, %134 : vector<1x8xf32>
      %136 = arith.mulf %132, %132 : vector<1x8xf32>
      %137 = arith.subf %135, %136 : vector<1x8xf32>
      %c0_155 = arith.constant 0 : index
      %c0_156 = arith.constant 0 : index
      %138 = vector.load %arg5[%c0_155, %c0_156] : memref<1x8xf32, #tpu.memory_space<vmem>>, vector<1x8xf32>
      %cst_157 = arith.constant 9.99999974E-6 : f32
      %139 = vector.broadcast %cst_157 : f32 to vector<1x8xf32>
      %140 = arith.addf %137, %139 : vector<1x8xf32>
      %141 = math.rsqrt %140 : vector<1x8xf32>
      %142 = arith.mulf %138, %141 : vector<1x8xf32>
      %c0_158 = arith.constant 0 : index
      %c0_159 = arith.constant 0 : index
      %143 = vector.load %arg6[%c0_158, %c0_159] : memref<1x8xf32, #tpu.memory_space<vmem>>, vector<1x8xf32>
      %144 = arith.mulf %132, %142 : vector<1x8xf32>
      %145 = arith.subf %143, %144 : vector<1x8xf32>
      %146 = vector.broadcast %142 : vector<1x8xf32> to vector<256x8xf32>
      %147 = arith.mulf %118, %146 : vector<256x8xf32>
      %148 = vector.broadcast %145 : vector<1x8xf32> to vector<256x8xf32>
      %149 = arith.addf %147, %148 : vector<256x8xf32>
      %cst_160 = arith.constant 0.000000e+00 : f32
      %150 = vector.broadcast %cst_160 : f32 to vector<256x8xf32>
      %151 = arith.maximumf %149, %150 : vector<256x8xf32>
      %152 = vector.extract_strided_slice %151 {offsets = [0, 0], sizes = [64, 8], strides = [1, 1]} : vector<256x8xf32> to vector<64x8xf32>
      %153 = vector.extract_strided_slice %151 {offsets = [64, 0], sizes = [64, 8], strides = [1, 1]} : vector<256x8xf32> to vector<64x8xf32>
      %154 = arith.maximumf %152, %153 : vector<64x8xf32>
      %155 = vector.extract_strided_slice %151 {offsets = [128, 0], sizes = [64, 8], strides = [1, 1]} : vector<256x8xf32> to vector<64x8xf32>
      %156 = vector.extract_strided_slice %151 {offsets = [192, 0], sizes = [64, 8], strides = [1, 1]} : vector<256x8xf32> to vector<64x8xf32>
      %157 = arith.maximumf %155, %156 : vector<64x8xf32>
      %158 = arith.maximumf %154, %157 : vector<64x8xf32>
      %159 = vector.extract_strided_slice %158 {offsets = [0, 0], sizes = [64, 1], strides = [1, 1]} : vector<64x8xf32> to vector<64x1xf32>
      %c0_161 = arith.constant 0 : index
      %c0_162 = arith.constant 0 : index
      %c0_163 = arith.constant 0 : index
      %160 = vector.load %arg7[%c0_161, %c0_162, %c0_163] : memref<8x64x8xf32, #tpu.memory_space<vmem>>, vector<1x64x8xf32>
      %161 = vector.shape_cast %160 : vector<1x64x8xf32> to vector<64x8xf32>
      %162 = vector.broadcast %159 : vector<64x1xf32> to vector<64x8xf32>
      %163 = arith.mulf %162, %161 : vector<64x8xf32>
      %164 = vector.extract_strided_slice %158 {offsets = [0, 1], sizes = [64, 1], strides = [1, 1]} : vector<64x8xf32> to vector<64x1xf32>
      %c1_164 = arith.constant 1 : index
      %c0_165 = arith.constant 0 : index
      %c0_166 = arith.constant 0 : index
      %165 = vector.load %arg7[%c1_164, %c0_165, %c0_166] : memref<8x64x8xf32, #tpu.memory_space<vmem>>, vector<1x64x8xf32>
      %166 = vector.shape_cast %165 : vector<1x64x8xf32> to vector<64x8xf32>
      %167 = vector.broadcast %164 : vector<64x1xf32> to vector<64x8xf32>
      %168 = arith.mulf %167, %166 : vector<64x8xf32>
      %169 = arith.addf %163, %168 : vector<64x8xf32>
      %170 = vector.extract_strided_slice %158 {offsets = [0, 2], sizes = [64, 1], strides = [1, 1]} : vector<64x8xf32> to vector<64x1xf32>
      %c2_167 = arith.constant 2 : index
      %c0_168 = arith.constant 0 : index
      %c0_169 = arith.constant 0 : index
      %171 = vector.load %arg7[%c2_167, %c0_168, %c0_169] : memref<8x64x8xf32, #tpu.memory_space<vmem>>, vector<1x64x8xf32>
      %172 = vector.shape_cast %171 : vector<1x64x8xf32> to vector<64x8xf32>
      %173 = vector.broadcast %170 : vector<64x1xf32> to vector<64x8xf32>
      %174 = arith.mulf %173, %172 : vector<64x8xf32>
      %175 = arith.addf %169, %174 : vector<64x8xf32>
      %176 = vector.extract_strided_slice %158 {offsets = [0, 3], sizes = [64, 1], strides = [1, 1]} : vector<64x8xf32> to vector<64x1xf32>
      %c3_170 = arith.constant 3 : index
      %c0_171 = arith.constant 0 : index
      %c0_172 = arith.constant 0 : index
      %177 = vector.load %arg7[%c3_170, %c0_171, %c0_172] : memref<8x64x8xf32, #tpu.memory_space<vmem>>, vector<1x64x8xf32>
      %178 = vector.shape_cast %177 : vector<1x64x8xf32> to vector<64x8xf32>
      %179 = vector.broadcast %176 : vector<64x1xf32> to vector<64x8xf32>
      %180 = arith.mulf %179, %178 : vector<64x8xf32>
      %181 = arith.addf %175, %180 : vector<64x8xf32>
      %182 = vector.extract_strided_slice %158 {offsets = [0, 4], sizes = [64, 1], strides = [1, 1]} : vector<64x8xf32> to vector<64x1xf32>
      %c4 = arith.constant 4 : index
      %c0_173 = arith.constant 0 : index
      %c0_174 = arith.constant 0 : index
      %183 = vector.load %arg7[%c4, %c0_173, %c0_174] : memref<8x64x8xf32, #tpu.memory_space<vmem>>, vector<1x64x8xf32>
      %184 = vector.shape_cast %183 : vector<1x64x8xf32> to vector<64x8xf32>
      %185 = vector.broadcast %182 : vector<64x1xf32> to vector<64x8xf32>
      %186 = arith.mulf %185, %184 : vector<64x8xf32>
      %187 = arith.addf %181, %186 : vector<64x8xf32>
      %188 = vector.extract_strided_slice %158 {offsets = [0, 5], sizes = [64, 1], strides = [1, 1]} : vector<64x8xf32> to vector<64x1xf32>
      %c5 = arith.constant 5 : index
      %c0_175 = arith.constant 0 : index
      %c0_176 = arith.constant 0 : index
      %189 = vector.load %arg7[%c5, %c0_175, %c0_176] : memref<8x64x8xf32, #tpu.memory_space<vmem>>, vector<1x64x8xf32>
      %190 = vector.shape_cast %189 : vector<1x64x8xf32> to vector<64x8xf32>
      %191 = vector.broadcast %188 : vector<64x1xf32> to vector<64x8xf32>
      %192 = arith.mulf %191, %190 : vector<64x8xf32>
      %193 = arith.addf %187, %192 : vector<64x8xf32>
      %194 = vector.extract_strided_slice %158 {offsets = [0, 6], sizes = [64, 1], strides = [1, 1]} : vector<64x8xf32> to vector<64x1xf32>
      %c6 = arith.constant 6 : index
      %c0_177 = arith.constant 0 : index
      %c0_178 = arith.constant 0 : index
      %195 = vector.load %arg7[%c6, %c0_177, %c0_178] : memref<8x64x8xf32, #tpu.memory_space<vmem>>, vector<1x64x8xf32>
      %196 = vector.shape_cast %195 : vector<1x64x8xf32> to vector<64x8xf32>
      %197 = vector.broadcast %194 : vector<64x1xf32> to vector<64x8xf32>
      %198 = arith.mulf %197, %196 : vector<64x8xf32>
      %199 = arith.addf %193, %198 : vector<64x8xf32>
      %200 = vector.extract_strided_slice %158 {offsets = [0, 7], sizes = [64, 1], strides = [1, 1]} : vector<64x8xf32> to vector<64x1xf32>
      %c7 = arith.constant 7 : index
      %c0_179 = arith.constant 0 : index
      %c0_180 = arith.constant 0 : index
      %201 = vector.load %arg7[%c7, %c0_179, %c0_180] : memref<8x64x8xf32, #tpu.memory_space<vmem>>, vector<1x64x8xf32>
      %202 = vector.shape_cast %201 : vector<1x64x8xf32> to vector<64x8xf32>
      %203 = vector.broadcast %200 : vector<64x1xf32> to vector<64x8xf32>
      %204 = arith.mulf %203, %202 : vector<64x8xf32>
      %205 = arith.addf %199, %204 : vector<64x8xf32>
      %cst_181 = arith.constant dense<0.000000e+00> : vector<8xf32>
      %206 = vector.multi_reduction <add>, %205, %cst_181 [0] : vector<64x8xf32> to vector<8xf32>
      %207 = vector.shape_cast %206 : vector<8xf32> to vector<1x8xf32>
      %c0_182 = arith.constant 0 : index
      %c0_183 = arith.constant 0 : index
      %208 = vector.load %arg8[%c0_182, %c0_183] : memref<1x8xf32, #tpu.memory_space<vmem>>, vector<1x8xf32>
      %209 = arith.addf %207, %208 : vector<1x8xf32>
      %210 = arith.index_cast %arg1 : i32 to index
      %c0_184 = arith.constant 0 : index
      %211 = vector.load %arg9[%210, %c0_184] : memref<2x8xf32, #tpu.memory_space<vmem>>, vector<1x8xf32>
      tpu.vector_store %arg9[%210, %c0_184], %209 {strides = array<i32>} : memref<2x8xf32, #tpu.memory_space<vmem>>, vector<1x8xf32>,
    } else {
    }
    return
  }
  func.func @transform_0(%arg0: i32, %arg1: i32) -> (i32, i32, i32, i32) {
    %c0_i32 = arith.constant 0 : i32
    %c0_i32_0 = arith.constant 0 : i32
    %c0_i32_1 = arith.constant 0 : i32
    %c0_i32_2 = arith.constant 0 : i32
    return %arg1, %c0_i32, %c0_i32_0, %c0_i32_1 : i32, i32, i32, i32
  }
  func.func @transform_1(%arg0: i32, %arg1: i32) -> (i32, i32) {
    %c0_i32 = arith.constant 0 : i32
    %c0_i32_0 = arith.constant 0 : i32
    %c0_i32_1 = arith.constant 0 : i32
    return %c0_i32, %c0_i32_0 : i32, i32
  }
  func.func @transform_2(%arg0: i32, %arg1: i32) -> (i32, i32) {
    %c0_i32 = arith.constant 0 : i32
    %c0_i32_0 = arith.constant 0 : i32
    %c0_i32_1 = arith.constant 0 : i32
    return %c0_i32, %c0_i32_0 : i32, i32
  }
  func.func @transform_3(%arg0: i32, %arg1: i32) -> (i32, i32) {
    %c0_i32 = arith.constant 0 : i32
    %c0_i32_0 = arith.constant 0 : i32
    %c0_i32_1 = arith.constant 0 : i32
    return %c0_i32, %c0_i32_0 : i32, i32
  }
  func.func @transform_4(%arg0: i32, %arg1: i32) -> (i32, i32) {
    %c0_i32 = arith.constant 0 : i32
    %c0_i32_0 = arith.constant 0 : i32
    %c0_i32_1 = arith.constant 0 : i32
    return %c0_i32, %c0_i32_0 : i32, i32
  }
  func.func @transform_5(%arg0: i32, %arg1: i32) -> (i32, i32, i32) {
    %c0_i32 = arith.constant 0 : i32
    %c0_i32_0 = arith.constant 0 : i32
    %c0_i32_1 = arith.constant 0 : i32
    %c0_i32_2 = arith.constant 0 : i32
    return %c0_i32, %c0_i32_0, %c0_i32_1 : i32, i32, i32
  }
  func.func @transform_6(%arg0: i32, %arg1: i32) -> (i32, i32) {
    %c0_i32 = arith.constant 0 : i32
    %c0_i32_0 = arith.constant 0 : i32
    %c0_i32_1 = arith.constant 0 : i32
    return %c0_i32, %c0_i32_0 : i32, i32
  }
  func.func @transform_7(%arg0: i32, %arg1: i32) -> (i32, i32) {
    %c0_i32 = arith.constant 0 : i32
    %c0_i32_0 = arith.constant 0 : i32
    %c0_i32_1 = arith.constant 0 : i32
    return %c0_i32, %c0_i32_0 : i32, i32
  }
}

</mosaic_0001>

<llo_original>
// kernel: student_net5_forward.1
$region0: #{student_net5_forward.1}
  #allocation0 [shape = 'u32[]', space=smem, size = 0x4, offset = 0x4, fixed_abs, tag = 'smem constant byte address 0x4 - core index']
  #allocation1 [shape = 'u32[144,128]{1,0:T(1,128)}', space=vmem, size = 0x12000, scoped, tag = 'internal scratch']
  #allocation2 [shape = 'f32[1,8]{1,0:T(1,128)}', space=vmem, size = 0x200, scoped, tag = 'scratch operand']
  #allocation3 [shape = 'f32[1,8]{1,0:T(1,128)}', space=vmem, size = 0x200, scoped, tag = 'scratch operand']
  %s0 = inlined_call_operand.vmem [shape: f32[8,9,9,3], index: 0, kind: input, shape index: {}]
  %s1 = inlined_call_operand.vmem [shape: bf16[27,8], index: 1, kind: input, shape index: {}]
  %s2 = inlined_call_operand.vmem [shape: f32[1,8], index: 2, kind: input, shape index: {}]
  %s3 = inlined_call_operand.vmem [shape: f32[1,8], index: 3, kind: input, shape index: {}]
  %s4 = inlined_call_operand.vmem [shape: f32[1,8], index: 4, kind: input, shape index: {}]
  %s5 = inlined_call_operand.vmem [shape: f32[8,64,8], index: 5, kind: input, shape index: {}]
  %s6 = inlined_call_operand.vmem [shape: f32[1,8], index: 6, kind: input, shape index: {}]
  %s7 = inlined_call_operand.hbm [shape: f32[2,8], index: 7, kind: output, shape index: {}]
  %s8 = sld [smem:[#allocation0]]
  $region73: #{student_net5_forward.1} parent=0
    _
  %s10 = ssub.s32 1, %s8
  %s11 = scalar_select 0, %s10, %s8
  $region1: #{student_net5_forward.1} parent=0
    #allocation4 [shape = 'u8[1024]{0}', space=vmem, size = 0x400, scoped, tag = 'output window, operand 0, single buffered']
    #allocation5 [shape = 's32[2]{0}', space=sflag, size = 0x8, scoped, tag = 'scoped memory for student_net5_forward.1']
    %12 = vsyncpa [#allocation5], 0
    loop: start=0, step=1, limit=6
    $region2: #{student_net5_forward.1} parent=1 // loop_pre_header
      _
    $region3: #{student_net5_forward.1} parent=1 // loop_header
      %s14 = sphi 0, %s18
      %p15 = scmp.ge.s32.totalorder %s14, 6
      %s21 = sphi 0, %s33
      %s22 = sphi 0, %s29
      %s23 = sphi 0, %s21
      %s24 = sphi 0, %s22
      %s25 = sphi 0, %s23
      %s26 = sphi 0, %s24
      %s36 = sphi 0, %s38
      %s39 = sphi 0, %s36
      %s40 = sphi 0, %s39
      %s56 = sphi 0, %s40
      %s60 = sphi 0, %s60
      %s62 = sphi 0, %s60
      %s63 = sphi 0, %s62
      %s77 = sphi 0, %s63
      %s81 = sphi 0, %s81
      %s83 = sphi 0, %s81
      %s84 = sphi 0, %s83
      %s98 = sphi 0, %s84
      %s102 = sphi 0, %s102
      %s104 = sphi 0, %s102
      %s105 = sphi 0, %s104
      %s119 = sphi 0, %s105
      %s123 = sphi 0, %s123
      %s125 = sphi 0, %s123
      %s126 = sphi 0, %s125
      %s140 = sphi 0, %s126
      %s144 = sphi 0, %s144
      %s146 = sphi 0, %s144
      %s147 = sphi 0, %s146
      %s161 = sphi 0, %s147
      %s165 = sphi 0, %s165
      %s167 = sphi 0, %s165
      %s168 = sphi 0, %s167
      %s182 = sphi 0, %s168
      %s186 = sphi 0, %s186
      %s188 = sphi 0, %s186
      %s189 = sphi 0, %s188
      %s203 = sphi 0, %s189
    $region4: #{student_net5_forward.1} parent=1 // loop_header_branch
      %17 = sbr.rel (%p15) target = $region8
    $region5: #{student_net5_forward.1} parent=1 // loop_body
      %s19 = ssub.s32 %s14, 1
      %s20 = ssub.s32 %s14, 2
      %s27 = sadd.s32 1, %s22
      %p28 = scmp.ge.s32.totalorder %s27, 2
      %s29 = scalar_select %p28, 0, %s27
      %s30 = sadd.s32 1, %s21
      %s31 = scalar_select %p28, %s30, %s21
      %p32 = scmp.ge.s32.totalorder %s31, 2
      %s33 = scalar_select %p32, 0, %s31
      %s34 = ssub.s32 %s22, %s29
      %p35 = scmp.eq.s32.totalorder %s34, 0
      %s37 = sadd.s32 %s36, 1
      %s38 = scalar_select %p35, %s36, %s37
      %p41 = pneg %p35
      %p42 = scmp.eq.s32.totalorder %s14, 3
      %p43 = por %p41, %p42
      %p44 = scmp.ne.s32.totalorder %s36, %s39
      %p45 = scmp.eq.s32.totalorder %s14, 0
      %p46 = por %p44, %p45
      %p47 = scmp.ne.s32.totalorder %s36, %s39
      %p48 = scmp.eq.s32.totalorder %s19, 3
      %p49 = por %p47, %p48
      %p50 = scmp.ne.s32.totalorder %s39, %s40
      %p51 = scmp.eq.s32.totalorder %s19, 0
      %p52 = por %p50, %p51
      %p53 = scmp.ne.s32.totalorder %s39, %s40
      %p54 = scmp.eq.s32.totalorder %s20, 3
      %p55 = por %p53, %p54
      %p57 = scmp.ne.s32.totalorder %s40, %s56
      %p58 = scmp.eq.s32.totalorder %s20, 0
      %p59 = por %p57, %p58
      %s61 = sadd.s32 %s60, 1
      %p64 = scmp.eq.s32.totalorder %s14, 3
      %p65 = scmp.ne.s32.totalorder %s60, %s62
      %p66 = scmp.eq.s32.totalorder %s14, 0
      %p67 = por %p65, %p66
      %p68 = scmp.ne.s32.totalorder %s60, %s62
      %p69 = scmp.eq.s32.totalorder %s19, 3
      %p70 = por %p68, %p69
      %p71 = scmp.ne.s32.totalorder %s62, %s63
      %p72 = scmp.eq.s32.totalorder %s19, 0
      %p73 = por %p71, %p72
      %p74 = scmp.ne.s32.totalorder %s62, %s63
      %p75 = scmp.eq.s32.totalorder %s20, 3
      %p76 = por %p74, %p75
      %p78 = scmp.ne.s32.totalorder %s63, %s77
      %p79 = scmp.eq.s32.totalorder %s20, 0
      %p80 = por %p78, %p79
      %s82 = sadd.s32 %s81, 1
      %p85 = scmp.eq.s32.totalorder %s14, 3
      %p86 = scmp.ne.s32.totalorder %s81, %s83
      %p87 = scmp.eq.s32.totalorder %s14, 0
      %p88 = por %p86, %p87
      %p89 = scmp.ne.s32.totalorder %s81, %s83
      %p90 = scmp.eq.s32.totalorder %s19, 3
      %p91 = por %p89, %p90
      %p92 = scmp.ne.s32.totalorder %s83, %s84
      %p93 = scmp.eq.s32.totalorder %s19, 0
      %p94 = por %p92, %p93
      %p95 = scmp.ne.s32.totalorder %s83, %s84
      %p96 = scmp.eq.s32.totalorder %s20, 3
      %p97 = por %p95, %p96
      %p99 = scmp.ne.s32.totalorder %s84, %s98
      %p100 = scmp.eq.s32.totalorder %s20, 0
      %p101 = por %p99, %p100
      %s103 = sadd.s32 %s102, 1
      %p106 = scmp.eq.s32.totalorder %s14, 3
      %p107 = scmp.ne.s32.totalorder %s102, %s104
      %p108 = scmp.eq.s32.totalorder %s14, 0
      %p109 = por %p107, %p108
      %p110 = scmp.ne.s32.totalorder %s102, %s104
      %p111 = scmp.eq.s32.totalorder %s19, 3
      %p112 = por %p110, %p111
      %p113 = scmp.ne.s32.totalorder %s104, %s105
      %p114 = scmp.eq.s32.totalorder %s19, 0
      %p115 = por %p113, %p114
      %p116 = scmp.ne.s32.totalorder %s104, %s105
      %p117 = scmp.eq.s32.totalorder %s20, 3
      %p118 = por %p116, %p117
      %p120 = scmp.ne.s32.totalorder %s105, %s119
      %p121 = scmp.eq.s32.totalorder %s20, 0
      %p122 = por %p120, %p121
      %s124 = sadd.s32 %s123, 1
      %p127 = scmp.eq.s32.totalorder %s14, 3
      %p128 = scmp.ne.s32.totalorder %s123, %s125
      %p129 = scmp.eq.s32.totalorder %s14, 0
      %p130 = por %p128, %p129
      %p131 = scmp.ne.s32.totalorder %s123, %s125
      %p132 = scmp.eq.s32.totalorder %s19, 3
      %p133 = por %p131, %p132
      %p134 = scmp.ne.s32.totalorder %s125, %s126
      %p135 = scmp.eq.s32.totalorder %s19, 0
      %p136 = por %p134, %p135
      %p137 = scmp.ne.s32.totalorder %s125, %s126
      %p138 = scmp.eq.s32.totalorder %s20, 3
      %p139 = por %p137, %p138
      %p141 = scmp.ne.s32.totalorder %s126, %s140
      %p142 = scmp.eq.s32.totalorder %s20, 0
      %p143 = por %p141, %p142
      %s145 = sadd.s32 %s144, 1
      %p148 = scmp.eq.s32.totalorder %s14, 3
      %p149 = scmp.ne.s32.totalorder %s144, %s146
      %p150 = scmp.eq.s32.totalorder %s14, 0
      %p151 = por %p149, %p150
      %p152 = scmp.ne.s32.totalorder %s144, %s146
      %p153 = scmp.eq.s32.totalorder %s19, 3
      %p154 = por %p152, %p153
      %p155 = scmp.ne.s32.totalorder %s146, %s147
      %p156 = scmp.eq.s32.totalorder %s19, 0
      %p157 = por %p155, %p156
      %p158 = scmp.ne.s32.totalorder %s146, %s147
      %p159 = scmp.eq.s32.totalorder %s20, 3
      %p160 = por %p158, %p159
      %p162 = scmp.ne.s32.totalorder %s147, %s161
      %p163 = scmp.eq.s32.totalorder %s20, 0
      %p164 = por %p162, %p163
      %s166 = sadd.s32 %s165, 1
      %p169 = scmp.eq.s32.totalorder %s14, 3
      %p170 = scmp.ne.s32.totalorder %s165, %s167
      %p171 = scmp.eq.s32.totalorder %s14, 0
      %p172 = por %p170, %p171
      %p173 = scmp.ne.s32.totalorder %s165, %s167
      %p174 = scmp.eq.s32.totalorder %s19, 3
      %p175 = por %p173, %p174
      %p176 = scmp.ne.s32.totalorder %s167, %s168
      %p177 = scmp.eq.s32.totalorder %s19, 0
      %p178 = por %p176, %p177
      %p179 = scmp.ne.s32.totalorder %s167, %s168
      %p180 = scmp.eq.s32.totalorder %s20, 3
      %p181 = por %p179, %p180
      %p183 = scmp.ne.s32.totalorder %s168, %s182
      %p184 = scmp.eq.s32.totalorder %s20, 0
      %p185 = por %p183, %p184
      %s187 = sadd.s32 %s186, 1
      %p190 = scmp.eq.s32.totalorder %s14, 3
      %p191 = scmp.ne.s32.totalorder %s186, %s188
      %p192 = scmp.eq.s32.totalorder %s14, 0
      %p193 = por %p191, %p192
      %p194 = scmp.ne.s32.totalorder %s186, %s188
      %p195 = scmp.eq.s32.totalorder %s19, 3
      %p196 = por %p194, %p195
      %p197 = scmp.ne.s32.totalorder %s188, %s189
      %p198 = scmp.eq.s32.totalorder %s19, 0
      %p199 = por %p197, %p198
      %p200 = scmp.ne.s32.totalorder %s188, %s189
      %p201 = scmp.eq.s32.totalorder %s20, 3
      %p202 = por %p200, %p201
      %p204 = scmp.ne.s32.totalorder %s189, %s203
      %p205 = scmp.eq.s32.totalorder %s20, 0
      %p206 = por %p204, %p205
      %p207 = scmp.le.s32.totalorder 1, %s14
      %p208 = scmp.lt.s32.totalorder %s14, 5
      %p209 = pnand %p207, %p208
      %p210 = pneg %p209
      // Predicated region
      $region9: #{student_net5_forward.1} parent=5 // pred_check
        _
      $region10: #{student_net5_forward.1} parent=5 // pred_check_branch
        %212 = sbr.rel (%p209) target = $region12
      $region11: #{student_net5_forward.1} parent=5 // pred_region
        %s213 = ssub.s32 %s14, 1
        // Predicated region
        $region13: #{student_net5_forward.1} parent=11 // pred_check
          %p214 = pneg %p73
        $region14: #{student_net5_forward.1} parent=11 // pred_check_branch
          %216 = sbr.rel (%p214) target = $region16
        $region15: #{student_net5_forward.1} parent=11 // pred_region
          _
        $region16: #{student_net5_forward.1} parent=11 // pred_fallthru
          _
        // Predicated region
        $region17: #{student_net5_forward.1} parent=11 // pred_check
          %p217 = pneg %p94
        $region18: #{student_net5_forward.1} parent=11 // pred_check_branch
          %219 = sbr.rel (%p217) target = $region20
        $region19: #{student_net5_forward.1} parent=11 // pred_region
          _
        $region20: #{student_net5_forward.1} parent=11 // pred_fallthru
          _
        // Predicated region
        $region21: #{student_net5_forward.1} parent=11 // pred_check
          %p220 = pneg %p115
        $region22: #{student_net5_forward.1} parent=11 // pred_check_branch
          %222 = sbr.rel (%p220) target = $region24
        $region23: #{student_net5_forward.1} parent=11 // pred_region
          _
        $region24: #{student_net5_forward.1} parent=11 // pred_fallthru
          _
        // Predicated region
        $region25: #{student_net5_forward.1} parent=11 // pred_check
          %p223 = pneg %p136
        $region26: #{student_net5_forward.1} parent=11 // pred_check_branch
          %225 = sbr.rel (%p223) target = $region28
        $region27: #{student_net5_forward.1} parent=11 // pred_region
          _
        $region28: #{student_net5_forward.1} parent=11 // pred_fallthru
          _
        // Predicated region
        $region29: #{student_net5_forward.1} parent=11 // pred_check
          %p226 = pneg %p157
        $region30: #{student_net5_forward.1} parent=11 // pred_check_branch
          %228 = sbr.rel (%p226) target = $region32
        $region31: #{student_net5_forward.1} parent=11 // pred_region
          _
        $region32: #{student_net5_forward.1} parent=11 // pred_fallthru
          _
        // Predicated region
        $region33: #{student_net5_forward.1} parent=11 // pred_check
          %p229 = pneg %p178
        $region34: #{student_net5_forward.1} parent=11 // pred_check_branch
          %231 = sbr.rel (%p229) target = $region36
        $region35: #{student_net5_forward.1} parent=11 // pred_region
          _
        $region36: #{student_net5_forward.1} parent=11 // pred_fallthru
          _
      $region12: #{student_net5_forward.1} parent=5 // pred_fallthru
        _
      %p232 = scmp.lt.s32.totalorder %s14, 4
      // Predicated region
      $region37: #{student_net5_forward.1} parent=5 // pred_check
        %p233 = pneg %p232
      $region38: #{student_net5_forward.1} parent=5 // pred_check_branch
        %235 = sbr.rel (%p233) target = $region40
      $region39: #{student_net5_forward.1} parent=5 // pred_region
        // Predicated region
        $region41: #{student_net5_forward.1} parent=39 // pred_check
          %p236 = pneg %p46
        $region42: #{student_net5_forward.1} parent=39 // pred_check_branch
          %238 = sbr.rel (%p236) target = $region44
        $region43: #{student_net5_forward.1} parent=39 // pred_region
          %s239 = smul.u32 4, %s22
          %p240 = scmp.lt.s32.totalorder %s239, 7
          %s241 = scalar_select %p240, %s239, 7
          %s242 = smul.addr %s241, 18
          %s243 = smul.addr %s242, 8
          %s244 = scalar_lea.vmem %s0, %s243
          %s245 = smul.u32 4, %s22
        $region44: #{student_net5_forward.1} parent=39 // pred_fallthru
          _
      $region40: #{student_net5_forward.1} parent=5 // pred_fallthru
        _
      %p246 = scmp.le.s32.totalorder 1, %s14
      %p247 = scmp.lt.s32.totalorder %s14, 5
      %p248 = pnand %p246, %p247
      %p249 = pneg %p248
      // Predicated region
      $region45: #{student_net5_forward.1} parent=5 // pred_check
        _
      $region46: #{student_net5_forward.1} parent=5 // pred_check_branch
        %251 = sbr.rel (%p248) target = $region48
      $region47: #{student_net5_forward.1} parent=5 // pred_region
        %s252 = ssub.s32 %s14, 1
        %s253 = smul.u32 4, %s24
        %p254 = scmp.lt.s32.totalorder %s253, 7
        %s255 = scalar_select %p254, %s253, 7
        %s256 = smul.addr %s255, 18
        %s257 = smul.addr %s256, 8
        %s258 = scalar_lea.vmem %s0, %s257
        %p259 = pneg %p52
        %p260 = pneg %p49
        %p261 = pneg %p73
        %p262 = pneg %p70
        %p263 = pneg %p94
        %p264 = pneg %p91
        %p265 = pneg %p115
        %p266 = pneg %p112
        %p267 = pneg %p136
        %p268 = pneg %p133
        %p269 = pneg %p157
        %p270 = pneg %p154
        %p271 = pneg %p178
        %p272 = pneg %p175
        %p273 = pneg %p199
        %p274 = pneg %p196
        %s275 = smul.u32 4, %s24
        %p276 = scmp.lt.s32.totalorder %s275, 7
        %s277 = scalar_select %p276, %s275, 7
        %s278 = smul.addr %s277, 18
        %s279 = smul.addr %s278, 8
        %s280 = scalar_lea.vmem %s0, %s279
        %s281 = smul.u32 4, %s24
        %v283 = vld [vmem:[%s280] sm:$0xff]
        %v284 = vld [vmem:[%s280 + $0x10] sm:$0xff]
        %v285 = vld [vmem:[%s280 + $0x20] sm:$0xff]
        %v286 = vld [vmem:[%s280 + $0x30] sm:$0xff]
        %v287 = vld [vmem:[%s280 + $0x40] sm:$0xff]
        %v288 = vld [vmem:[%s280 + $0x50] sm:$0xff]
        %v289 = vld [vmem:[%s280 + $0x60] sm:$0xff]
        %v290 = vld [vmem:[%s280 + $0x70] sm:$0xff]
        %s291 = scalar_lea.vmem %s280, 144
        %v292 = vld [vmem:[%s291] sm:$0xff]
        %v293 = vld [vmem:[%s291 + $0x10] sm:$0xff]
        %v294 = vld [vmem:[%s291 + $0x20] sm:$0xff]
        %v295 = vld [vmem:[%s291 + $0x30] sm:$0xff]
        %v296 = vld [vmem:[%s291 + $0x40] sm:$0xff]
        %v297 = vld [vmem:[%s291 + $0x50] sm:$0xff]
        %v298 = vld [vmem:[%s291 + $0x60] sm:$0xff]
        %v299 = vld [vmem:[%s291 + $0x70] sm:$0xff]
        %v300 = vld [vmem:[%s280 + $0x1] sm:$0xff]
        %v301 = vld [vmem:[%s280 + $0x11] sm:$0xff]
        %v302 = vld [vmem:[%s280 + $0x21] sm:$0xff]
        %v303 = vld [vmem:[%s280 + $0x31] sm:$0xff]
        %v304 = vld [vmem:[%s280 + $0x41] sm:$0xff]
        %v305 = vld [vmem:[%s280 + $0x51] sm:$0xff]
        %v306 = vld [vmem:[%s280 + $0x61] sm:$0xff]
        %v307 = vld [vmem:[%s280 + $0x71] sm:$0xff]
        %s308 = scalar_lea.vmem %s280, 288
        %v309 = vld [vmem:[%s308] sm:$0xff]
        %v310 = vld [vmem:[%s308 + $0x10] sm:$0xff]
        %v311 = vld [vmem:[%s308 + $0x20] sm:$0xff]
        %v312 = vld [vmem:[%s308 + $0x30] sm:$0xff]
        %v313 = vld [vmem:[%s308 + $0x40] sm:$0xff]
        %v314 = vld [vmem:[%s308 + $0x50] sm:$0xff]
        %v315 = vld [vmem:[%s308 + $0x60] sm:$0xff]
        %v316 = vld [vmem:[%s308 + $0x70] sm:$0xff]
        %s317 = scalar_lea.vmem %s280, 432
        %v318 = vld [vmem:[%s317] sm:$0xff]
        %v319 = vld [vmem:[%s317 + $0x10] sm:$0xff]
        %v320 = vld [vmem:[%s317 + $0x20] sm:$0xff]
        %v321 = vld [vmem:[%s317 + $0x30] sm:$0xff]
        %v322 = vld [vmem:[%s317 + $0x40] sm:$0xff]
        %v323 = vld [vmem:[%s317 + $0x50] sm:$0xff]
        %v324 = vld [vmem:[%s317 + $0x60] sm:$0xff]
        %v325 = vld [vmem:[%s317 + $0x70] sm:$0xff]
        %v326 = vld [vmem:[%s308 + $0x1] sm:$0xff]
        %v327 = vld [vmem:[%s308 + $0x11] sm:$0xff]
        %v328 = vld [vmem:[%s308 + $0x21] sm:$0xff]
        %v329 = vld [vmem:[%s308 + $0x31] sm:$0xff]
        %v330 = vld [vmem:[%s308 + $0x41] sm:$0xff]
        %v331 = vld [vmem:[%s308 + $0x51] sm:$0xff]
        %v332 = vld [vmem:[%s308 + $0x61] sm:$0xff]
        %v333 = vld [vmem:[%s308 + $0x71] sm:$0xff]
        %s334 = scalar_lea.vmem %s280, 16
        %v335 = vld [vmem:[%s334] sm:$0xff]
        %v336 = vld [vmem:[%s334 + $0x10] sm:$0xff]
        %v337 = vld [vmem:[%s334 + $0x20] sm:$0xff]
        %v338 = vld [vmem:[%s334 + $0x30] sm:$0xff]
        %v339 = vld [vmem:[%s334 + $0x40] sm:$0xff]
        %v340 = vld [vmem:[%s334 + $0x50] sm:$0xff]
        %v341 = vld [vmem:[%s334 + $0x60] sm:$0xff]
        %v342 = vld [vmem:[%s334 + $0x70] sm:$0xff]
        %s343 = scalar_lea.vmem %s280, 160
        %v344 = vld [vmem:[%s343] sm:$0xff]
        %v345 = vld [vmem:[%s343 + $0x10] sm:$0xff]
        %v346 = vld [vmem:[%s343 + $0x20] sm:$0xff]
        %v347 = vld [vmem:[%s343 + $0x30] sm:$0xff]
        %v348 = vld [vmem:[%s343 + $0x40] sm:$0xff]
        %v349 = vld [vmem:[%s343 + $0x50] sm:$0xff]
        %v350 = vld [vmem:[%s343 + $0x60] sm:$0xff]
        %v351 = vld [vmem:[%s343 + $0x70] sm:$0xff]
        %v352 = vld [vmem:[%s334 + $0x1] sm:$0xff]
        %v353 = vld [vmem:[%s334 + $0x11] sm:$0xff]
        %v354 = vld [vmem:[%s334 + $0x21] sm:$0xff]
        %v355 = vld [vmem:[%s334 + $0x31] sm:$0xff]
        %v356 = vld [vmem:[%s334 + $0x41] sm:$0xff]
        %v357 = vld [vmem:[%s334 + $0x51] sm:$0xff]
        %v358 = vld [vmem:[%s334 + $0x61] sm:$0xff]
        %v359 = vld [vmem:[%s334 + $0x71] sm:$0xff]
        %368 = vrot.lane.b32.xlu0 %v292, 3
        %v369 = vpop.permute.xlu0 %368
        %370 = vrot.lane.b32.xlu0 %v293, 3
        %v371 = vpop.permute.xlu0 %370
        %372 = vrot.lane.b32.xlu0 %v294, 3
        %v373 = vpop.permute.xlu0 %372
        %374 = vrot.lane.b32.xlu0 %v295, 3
        %v375 = vpop.permute.xlu0 %374
        %376 = vrot.lane.b32.xlu0 %v296, 3
        %v377 = vpop.permute.xlu0 %376
        %378 = vrot.lane.b32.xlu0 %v297, 3
        %v379 = vpop.permute.xlu0 %378
        %380 = vrot.lane.b32.xlu0 %v298, 3
        %v381 = vpop.permute.xlu0 %380
        %382 = vrot.lane.b32.xlu0 %v299, 3
        %v383 = vpop.permute.xlu0 %382
        %400 = vrot.lane.b32.xlu0 %v300, 6
        %v401 = vpop.permute.xlu0 %400
        %402 = vrot.lane.b32.xlu0 %v301, 6
        %v403 = vpop.permute.xlu0 %402
        %404 = vrot.lane.b32.xlu0 %v302, 6
        %v405 = vpop.permute.xlu0 %404
        %406 = vrot.lane.b32.xlu0 %v303, 6
        %v407 = vpop.permute.xlu0 %406
        %408 = vrot.lane.b32.xlu0 %v304, 6
        %v409 = vpop.permute.xlu0 %408
        %410 = vrot.lane.b32.xlu0 %v305, 6
        %v411 = vpop.permute.xlu0 %410
        %412 = vrot.lane.b32.xlu0 %v306, 6
        %v413 = vpop.permute.xlu0 %412
        %414 = vrot.lane.b32.xlu0 %v307, 6
        %v415 = vpop.permute.xlu0 %414
        %432 = vrot.lane.b32.xlu0 %v309, 9
        %v433 = vpop.permute.xlu0 %432
        %434 = vrot.lane.b32.xlu0 %v310, 9
        %v435 = vpop.permute.xlu0 %434
        %436 = vrot.lane.b32.xlu0 %v311, 9
        %v437 = vpop.permute.xlu0 %436
        %438 = vrot.lane.b32.xlu0 %v312, 9
        %v439 = vpop.permute.xlu0 %438
        %440 = vrot.lane.b32.xlu0 %v313, 9
        %v441 = vpop.permute.xlu0 %440
        %442 = vrot.lane.b32.xlu0 %v314, 9
        %v443 = vpop.permute.xlu0 %442
        %444 = vrot.lane.b32.xlu0 %v315, 9
        %v445 = vpop.permute.xlu0 %444
        %446 = vrot.lane.b32.xlu0 %v316, 9
        %v447 = vpop.permute.xlu0 %446
        %464 = vrot.lane.b32.xlu0 %v318, 12
        %v465 = vpop.permute.xlu0 %464
        %466 = vrot.lane.b32.xlu0 %v319, 12
        %v467 = vpop.permute.xlu0 %466
        %468 = vrot.lane.b32.xlu0 %v320, 12
        %v469 = vpop.permute.xlu0 %468
        %470 = vrot.lane.b32.xlu0 %v321, 12
        %v471 = vpop.permute.xlu0 %470
        %472 = vrot.lane.b32.xlu0 %v322, 12
        %v473 = vpop.permute.xlu0 %472
        %474 = vrot.lane.b32.xlu0 %v323, 12
        %v475 = vpop.permute.xlu0 %474
        %476 = vrot.lane.b32.xlu0 %v324, 12
        %v477 = vpop.permute.xlu0 %476
        %478 = vrot.lane.b32.xlu0 %v325, 12
        %v479 = vpop.permute.xlu0 %478
        %496 = vrot.lane.b32.xlu0 %v326, 15
        %v497 = vpop.permute.xlu0 %496
        %498 = vrot.lane.b32.xlu0 %v327, 15
        %v499 = vpop.permute.xlu0 %498
        %500 = vrot.lane.b32.xlu0 %v328, 15
        %v501 = vpop.permute.xlu0 %500
        %502 = vrot.lane.b32.xlu0 %v329, 15
        %v503 = vpop.permute.xlu0 %502
        %504 = vrot.lane.b32.xlu0 %v330, 15
        %v505 = vpop.permute.xlu0 %504
        %506 = vrot.lane.b32.xlu0 %v331, 15
        %v507 = vpop.permute.xlu0 %506
        %508 = vrot.lane.b32.xlu0 %v332, 15
        %v509 = vpop.permute.xlu0 %508
        %510 = vrot.lane.b32.xlu0 %v333, 15
        %v511 = vpop.permute.xlu0 %510
        %528 = vrot.lane.b32.xlu0 %v335, 18
        %v529 = vpop.permute.xlu0 %528
        %530 = vrot.lane.b32.xlu0 %v336, 18
        %v531 = vpop.permute.xlu0 %530
        %532 = vrot.lane.b32.xlu0 %v337, 18
        %v533 = vpop.permute.xlu0 %532
        %534 = vrot.lane.b32.xlu0 %v338, 18
        %v535 = vpop.permute.xlu0 %534
        %536 = vrot.lane.b32.xlu0 %v339, 18
        %v537 = vpop.permute.xlu0 %536
        %538 = vrot.lane.b32.xlu0 %v340, 18
        %v539 = vpop.permute.xlu0 %538
        %540 = vrot.lane.b32.xlu0 %v341, 18
        %v541 = vpop.permute.xlu0 %540
        %542 = vrot.lane.b32.xlu0 %v342, 18
        %v543 = vpop.permute.xlu0 %542
        %560 = vrot.lane.b32.xlu0 %v344, 21
        %v561 = vpop.permute.xlu0 %560
        %562 = vrot.lane.b32.xlu0 %v345, 21
        %v563 = vpop.permute.xlu0 %562
        %564 = vrot.lane.b32.xlu0 %v346, 21
        %v565 = vpop.permute.xlu0 %564
        %566 = vrot.lane.b32.xlu0 %v347, 21
        %v567 = vpop.permute.xlu0 %566
        %568 = vrot.lane.b32.xlu0 %v348, 21
        %v569 = vpop.permute.xlu0 %568
        %570 = vrot.lane.b32.xlu0 %v349, 21
        %v571 = vpop.permute.xlu0 %570
        %572 = vrot.lane.b32.xlu0 %v350, 21
        %v573 = vpop.permute.xlu0 %572
        %574 = vrot.lane.b32.xlu0 %v351, 21
        %v575 = vpop.permute.xlu0 %574
        %592 = vrot.lane.b32.xlu0 %v352, 24
        %v593 = vpop.permute.xlu0 %592
        %594 = vrot.lane.b32.xlu0 %v353, 24
        %v595 = vpop.permute.xlu0 %594
        %596 = vrot.lane.b32.xlu0 %v354, 24
        %v597 = vpop.permute.xlu0 %596
        %598 = vrot.lane.b32.xlu0 %v355, 24
        %v599 = vpop.permute.xlu0 %598
        %600 = vrot.lane.b32.xlu0 %v356, 24
        %v601 = vpop.permute.xlu0 %600
        %602 = vrot.lane.b32.xlu0 %v357, 24
        %v603 = vpop.permute.xlu0 %602
        %604 = vrot.lane.b32.xlu0 %v358, 24
        %v605 = vpop.permute.xlu0 %604
        %606 = vrot.lane.b32.xlu0 %v359, 24
        %v607 = vpop.permute.xlu0 %606
        %vm616 = vcmask 23552
        %v617 = vsel %vm616, %v283, %v369
        %v618 = vsel %vm616, %v284, %v371
        %v619 = vsel %vm616, %v285, %v373
        %v620 = vsel %vm616, %v286, %v375
        %v621 = vsel %vm616, %v287, %v377
        %v622 = vsel %vm616, %v288, %v379
        %v623 = vsel %vm616, %v289, %v381
        %v624 = vsel %vm616, %v290, %v383
        %vm625 = vcmask 48128
        %v626 = vsel %vm625, %v617, %v401
        %v627 = vsel %vm625, %v618, %v403
        %v628 = vsel %vm625, %v619, %v405
        %v629 = vsel %vm625, %v620, %v407
        %v630 = vsel %vm625, %v621, %v409
        %v631 = vsel %vm625, %v622, %v411
        %v632 = vsel %vm625, %v623, %v413
        %v633 = vsel %vm625, %v624, %v415
        %vm634 = vcmask 72704
        %v635 = vsel %vm634, %v626, %v433
        %v636 = vsel %vm634, %v627, %v435
        %v637 = vsel %vm634, %v628, %v437
        %v638 = vsel %vm634, %v629, %v439
        %v639 = vsel %vm634, %v630, %v441
        %v640 = vsel %vm634, %v631, %v443
        %v641 = vsel %vm634, %v632, %v445
        %v642 = vsel %vm634, %v633, %v447
        %vm643 = vcmask 97280
        %v644 = vsel %vm643, %v635, %v465
        %v645 = vsel %vm643, %v636, %v467
        %v646 = vsel %vm643, %v637, %v469
        %v647 = vsel %vm643, %v638, %v471
        %v648 = vsel %vm643, %v639, %v473
        %v649 = vsel %vm643, %v640, %v475
        %v650 = vsel %vm643, %v641, %v477
        %v651 = vsel %vm643, %v642, %v479
        %vm652 = vcmask 121856
        %v653 = vsel %vm652, %v644, %v497
        %v654 = vsel %vm652, %v645, %v499
        %v655 = vsel %vm652, %v646, %v501
        %v656 = vsel %vm652, %v647, %v503
        %v657 = vsel %vm652, %v648, %v505
        %v658 = vsel %vm652, %v649, %v507
        %v659 = vsel %vm652, %v650, %v509
        %v660 = vsel %vm652, %v651, %v511
        %vm661 = vcmask 146432
        %v662 = vsel %vm661, %v653, %v529
        %v663 = vsel %vm661, %v654, %v531
        %v664 = vsel %vm661, %v655, %v533
        %v665 = vsel %vm661, %v656, %v535
        %v666 = vsel %vm661, %v657, %v537
        %v667 = vsel %vm661, %v658, %v539
        %v668 = vsel %vm661, %v659, %v541
        %v669 = vsel %vm661, %v660, %v543
        %vm670 = vcmask 171008
        %v671 = vsel %vm670, %v662, %v561
        %v672 = vsel %vm670, %v663, %v563
        %v673 = vsel %vm670, %v664, %v565
        %v674 = vsel %vm670, %v665, %v567
        %v675 = vsel %vm670, %v666, %v569
        %v676 = vsel %vm670, %v667, %v571
        %v677 = vsel %vm670, %v668, %v573
        %v678 = vsel %vm670, %v669, %v575
        %vm679 = vcmask 195584
        %v680 = vsel %vm679, %v671, %v593
        %v681 = vsel %vm679, %v672, %v595
        %v682 = vsel %vm679, %v673, %v597
        %v683 = vsel %vm679, %v674, %v599
        %v684 = vsel %vm679, %v675, %v601
        %v685 = vsel %vm679, %v676, %v603
        %v686 = vsel %vm679, %v677, %v605
        %v687 = vsel %vm679, %v678, %v607
        %v688 = vld [vmem:[%s291 + $0x1] sm:$0xff]
        %v689 = vld [vmem:[%s291 + $0x11] sm:$0xff]
        %v690 = vld [vmem:[%s291 + $0x21] sm:$0xff]
        %v691 = vld [vmem:[%s291 + $0x31] sm:$0xff]
        %v692 = vld [vmem:[%s291 + $0x41] sm:$0xff]
        %v693 = vld [vmem:[%s291 + $0x51] sm:$0xff]
        %v694 = vld [vmem:[%s291 + $0x61] sm:$0xff]
        %v695 = vld [vmem:[%s291 + $0x71] sm:$0xff]
        %v696 = vld [vmem:[%s317 + $0x1] sm:$0xff]
        %v697 = vld [vmem:[%s317 + $0x11] sm:$0xff]
        %v698 = vld [vmem:[%s317 + $0x21] sm:$0xff]
        %v699 = vld [vmem:[%s317 + $0x31] sm:$0xff]
        %v700 = vld [vmem:[%s317 + $0x41] sm:$0xff]
        %v701 = vld [vmem:[%s317 + $0x51] sm:$0xff]
        %v702 = vld [vmem:[%s317 + $0x61] sm:$0xff]
        %v703 = vld [vmem:[%s317 + $0x71] sm:$0xff]
        %v704 = vld [vmem:[%s343 + $0x1] sm:$0xff]
        %v705 = vld [vmem:[%s343 + $0x11] sm:$0xff]
        %v706 = vld [vmem:[%s343 + $0x21] sm:$0xff]
        %v707 = vld [vmem:[%s343 + $0x31] sm:$0xff]
        %v708 = vld [vmem:[%s343 + $0x41] sm:$0xff]
        %v709 = vld [vmem:[%s343 + $0x51] sm:$0xff]
        %v710 = vld [vmem:[%s343 + $0x61] sm:$0xff]
        %v711 = vld [vmem:[%s343 + $0x71] sm:$0xff]
        %712 = vrot.lane.b32.xlu0 %v300, 3
        %v713 = vpop.permute.xlu0 %712
        %714 = vrot.lane.b32.xlu0 %v301, 3
        %v715 = vpop.permute.xlu0 %714
        %716 = vrot.lane.b32.xlu0 %v302, 3
        %v717 = vpop.permute.xlu0 %716
        %718 = vrot.lane.b32.xlu0 %v303, 3
        %v719 = vpop.permute.xlu0 %718
        %720 = vrot.lane.b32.xlu0 %v304, 3
        %v721 = vpop.permute.xlu0 %720
        %722 = vrot.lane.b32.xlu0 %v305, 3
        %v723 = vpop.permute.xlu0 %722
        %724 = vrot.lane.b32.xlu0 %v306, 3
        %v725 = vpop.permute.xlu0 %724
        %726 = vrot.lane.b32.xlu0 %v307, 3
        %v727 = vpop.permute.xlu0 %726
        %744 = vrot.lane.b32.xlu0 %v688, 6
        %v745 = vpop.permute.xlu0 %744
        %746 = vrot.lane.b32.xlu0 %v689, 6
        %v747 = vpop.permute.xlu0 %746
        %748 = vrot.lane.b32.xlu0 %v690, 6
        %v749 = vpop.permute.xlu0 %748
        %750 = vrot.lane.b32.xlu0 %v691, 6
        %v751 = vpop.permute.xlu0 %750
        %752 = vrot.lane.b32.xlu0 %v692, 6
        %v753 = vpop.permute.xlu0 %752
        %754 = vrot.lane.b32.xlu0 %v693, 6
        %v755 = vpop.permute.xlu0 %754
        %756 = vrot.lane.b32.xlu0 %v694, 6
        %v757 = vpop.permute.xlu0 %756
        %758 = vrot.lane.b32.xlu0 %v695, 6
        %v759 = vpop.permute.xlu0 %758
        %768 = vrot.lane.b32.xlu0 %v318, 9
        %v769 = vpop.permute.xlu0 %768
        %770 = vrot.lane.b32.xlu0 %v319, 9
        %v771 = vpop.permute.xlu0 %770
        %772 = vrot.lane.b32.xlu0 %v320, 9
        %v773 = vpop.permute.xlu0 %772
        %774 = vrot.lane.b32.xlu0 %v321, 9
        %v775 = vpop.permute.xlu0 %774
        %776 = vrot.lane.b32.xlu0 %v322, 9
        %v777 = vpop.permute.xlu0 %776
        %778 = vrot.lane.b32.xlu0 %v323, 9
        %v779 = vpop.permute.xlu0 %778
        %780 = vrot.lane.b32.xlu0 %v324, 9
        %v781 = vpop.permute.xlu0 %780
        %782 = vrot.lane.b32.xlu0 %v325, 9
        %v783 = vpop.permute.xlu0 %782
        %792 = vrot.lane.b32.xlu0 %v326, 12
        %v793 = vpop.permute.xlu0 %792
        %794 = vrot.lane.b32.xlu0 %v327, 12
        %v795 = vpop.permute.xlu0 %794
        %796 = vrot.lane.b32.xlu0 %v328, 12
        %v797 = vpop.permute.xlu0 %796
        %798 = vrot.lane.b32.xlu0 %v329, 12
        %v799 = vpop.permute.xlu0 %798
        %800 = vrot.lane.b32.xlu0 %v330, 12
        %v801 = vpop.permute.xlu0 %800
        %802 = vrot.lane.b32.xlu0 %v331, 12
        %v803 = vpop.permute.xlu0 %802
        %804 = vrot.lane.b32.xlu0 %v332, 12
        %v805 = vpop.permute.xlu0 %804
        %806 = vrot.lane.b32.xlu0 %v333, 12
        %v807 = vpop.permute.xlu0 %806
        %824 = vrot.lane.b32.xlu0 %v696, 15
        %v825 = vpop.permute.xlu0 %824
        %826 = vrot.lane.b32.xlu0 %v697, 15
        %v827 = vpop.permute.xlu0 %826
        %828 = vrot.lane.b32.xlu0 %v698, 15
        %v829 = vpop.permute.xlu0 %828
        %830 = vrot.lane.b32.xlu0 %v699, 15
        %v831 = vpop.permute.xlu0 %830
        %832 = vrot.lane.b32.xlu0 %v700, 15
        %v833 = vpop.permute.xlu0 %832
        %834 = vrot.lane.b32.xlu0 %v701, 15
        %v835 = vpop.permute.xlu0 %834
        %836 = vrot.lane.b32.xlu0 %v702, 15
        %v837 = vpop.permute.xlu0 %836
        %838 = vrot.lane.b32.xlu0 %v703, 15
        %v839 = vpop.permute.xlu0 %838
        %848 = vrot.lane.b32.xlu0 %v344, 18
        %v849 = vpop.permute.xlu0 %848
        %850 = vrot.lane.b32.xlu0 %v345, 18
        %v851 = vpop.permute.xlu0 %850
        %852 = vrot.lane.b32.xlu0 %v346, 18
        %v853 = vpop.permute.xlu0 %852
        %854 = vrot.lane.b32.xlu0 %v347, 18
        %v855 = vpop.permute.xlu0 %854
        %856 = vrot.lane.b32.xlu0 %v348, 18
        %v857 = vpop.permute.xlu0 %856
        %858 = vrot.lane.b32.xlu0 %v349, 18
        %v859 = vpop.permute.xlu0 %858
        %860 = vrot.lane.b32.xlu0 %v350, 18
        %v861 = vpop.permute.xlu0 %860
        %862 = vrot.lane.b32.xlu0 %v351, 18
        %v863 = vpop.permute.xlu0 %862
        %872 = vrot.lane.b32.xlu0 %v352, 21
        %v873 = vpop.permute.xlu0 %872
        %874 = vrot.lane.b32.xlu0 %v353, 21
        %v875 = vpop.permute.xlu0 %874
        %876 = vrot.lane.b32.xlu0 %v354, 21
        %v877 = vpop.permute.xlu0 %876
        %878 = vrot.lane.b32.xlu0 %v355, 21
        %v879 = vpop.permute.xlu0 %878
        %880 = vrot.lane.b32.xlu0 %v356, 21
        %v881 = vpop.permute.xlu0 %880
        %882 = vrot.lane.b32.xlu0 %v357, 21
        %v883 = vpop.permute.xlu0 %882
        %884 = vrot.lane.b32.xlu0 %v358, 21
        %v885 = vpop.permute.xlu0 %884
        %886 = vrot.lane.b32.xlu0 %v359, 21
        %v887 = vpop.permute.xlu0 %886
        %904 = vrot.lane.b32.xlu0 %v704, 24
        %v905 = vpop.permute.xlu0 %904
        %906 = vrot.lane.b32.xlu0 %v705, 24
        %v907 = vpop.permute.xlu0 %906
        %908 = vrot.lane.b32.xlu0 %v706, 24
        %v909 = vpop.permute.xlu0 %908
        %910 = vrot.lane.b32.xlu0 %v707, 24
        %v911 = vpop.permute.xlu0 %910
        %912 = vrot.lane.b32.xlu0 %v708, 24
        %v913 = vpop.permute.xlu0 %912
        %914 = vrot.lane.b32.xlu0 %v709, 24
        %v915 = vpop.permute.xlu0 %914
        %916 = vrot.lane.b32.xlu0 %v710, 24
        %v917 = vpop.permute.xlu0 %916
        %918 = vrot.lane.b32.xlu0 %v711, 24
        %v919 = vpop.permute.xlu0 %918
        %v928 = vsel %vm616, %v292, %v713
        %v929 = vsel %vm616, %v293, %v715
        %v930 = vsel %vm616, %v294, %v717
        %v931 = vsel %vm616, %v295, %v719
        %v932 = vsel %vm616, %v296, %v721
        %v933 = vsel %vm616, %v297, %v723
        %v934 = vsel %vm616, %v298, %v725
        %v935 = vsel %vm616, %v299, %v727
        %v936 = vsel %vm625, %v928, %v745
        %v937 = vsel %vm625, %v929, %v747
        %v938 = vsel %vm625, %v930, %v749
        %v939 = vsel %vm625, %v931, %v751
        %v940 = vsel %vm625, %v932, %v753
        %v941 = vsel %vm625, %v933, %v755
        %v942 = vsel %vm625, %v934, %v757
        %v943 = vsel %vm625, %v935, %v759
        %v944 = vsel %vm634, %v936, %v769
        %v945 = vsel %vm634, %v937, %v771
        %v946 = vsel %vm634, %v938, %v773
        %v947 = vsel %vm634, %v939, %v775
        %v948 = vsel %vm634, %v940, %v777
        %v949 = vsel %vm634, %v941, %v779
        %v950 = vsel %vm634, %v942, %v781
        %v951 = vsel %vm634, %v943, %v783
        %v952 = vsel %vm643, %v944, %v793
        %v953 = vsel %vm643, %v945, %v795
        %v954 = vsel %vm643, %v946, %v797
        %v955 = vsel %vm643, %v947, %v799
        %v956 = vsel %vm643, %v948, %v801
        %v957 = vsel %vm643, %v949, %v803
        %v958 = vsel %vm643, %v950, %v805
        %v959 = vsel %vm643, %v951, %v807
        %v960 = vsel %vm652, %v952, %v825
        %v961 = vsel %vm652, %v953, %v827
        %v962 = vsel %vm652, %v954, %v829
        %v963 = vsel %vm652, %v955, %v831
        %v964 = vsel %vm652, %v956, %v833
        %v965 = vsel %vm652, %v957, %v835
        %v966 = vsel %vm652, %v958, %v837
        %v967 = vsel %vm652, %v959, %v839
        %v968 = vsel %vm661, %v960, %v849
        %v969 = vsel %vm661, %v961, %v851
        %v970 = vsel %vm661, %v962, %v853
        %v971 = vsel %vm661, %v963, %v855
        %v972 = vsel %vm661, %v964, %v857
        %v973 = vsel %vm661, %v965, %v859
        %v974 = vsel %vm661, %v966, %v861
        %v975 = vsel %vm661, %v967, %v863
        %v976 = vsel %vm670, %v968, %v873
        %v977 = vsel %vm670, %v969, %v875
        %v978 = vsel %vm670, %v970, %v877
        %v979 = vsel %vm670, %v971, %v879
        %v980 = vsel %vm670, %v972, %v881
        %v981 = vsel %vm670, %v973, %v883
        %v982 = vsel %vm670, %v974, %v885
        %v983 = vsel %vm670, %v975, %v887
        %v984 = vsel %vm679, %v976, %v905
        %v985 = vsel %vm679, %v977, %v907
        %v986 = vsel %vm679, %v978, %v909
        %v987 = vsel %vm679, %v979, %v911
        %v988 = vsel %vm679, %v980, %v913
        %v989 = vsel %vm679, %v981, %v915
        %v990 = vsel %vm679, %v982, %v917
        %v991 = vsel %vm679, %v983, %v919
        %s992 = scalar_lea.vmem %s280, 304
        %v993 = vld [vmem:[%s992] sm:$0xff]
        %v994 = vld [vmem:[%s992 + $0x10] sm:$0xff]
        %v995 = vld [vmem:[%s992 + $0x20] sm:$0xff]
        %v996 = vld [vmem:[%s992 + $0x30] sm:$0xff]
        %v997 = vld [vmem:[%s992 + $0x40] sm:$0xff]
        %v998 = vld [vmem:[%s992 + $0x50] sm:$0xff]
        %v999 = vld [vmem:[%s992 + $0x60] sm:$0xff]
        %v1000 = vld [vmem:[%s992 + $0x70] sm:$0xff]
        %s1001 = scalar_lea.vmem %s280, 448
        %v1002 = vld [vmem:[%s1001] sm:$0xff]
        %v1003 = vld [vmem:[%s1001 + $0x10] sm:$0xff]
        %v1004 = vld [vmem:[%s1001 + $0x20] sm:$0xff]
        %v1005 = vld [vmem:[%s1001 + $0x30] sm:$0xff]
        %v1006 = vld [vmem:[%s1001 + $0x40] sm:$0xff]
        %v1007 = vld [vmem:[%s1001 + $0x50] sm:$0xff]
        %v1008 = vld [vmem:[%s1001 + $0x60] sm:$0xff]
        %v1009 = vld [vmem:[%s1001 + $0x70] sm:$0xff]
        %v1010 = vld [vmem:[%s992 + $0x1] sm:$0xff]
        %v1011 = vld [vmem:[%s992 + $0x11] sm:$0xff]
        %v1012 = vld [vmem:[%s992 + $0x21] sm:$0xff]
        %v1013 = vld [vmem:[%s992 + $0x31] sm:$0xff]
        %v1014 = vld [vmem:[%s992 + $0x41] sm:$0xff]
        %v1015 = vld [vmem:[%s992 + $0x51] sm:$0xff]
        %v1016 = vld [vmem:[%s992 + $0x61] sm:$0xff]
        %v1017 = vld [vmem:[%s992 + $0x71] sm:$0xff]
        %1018 = vrot.lane.b32.xlu0 %v318, 3
        %v1019 = vpop.permute.xlu0 %1018
        %1020 = vrot.lane.b32.xlu0 %v319, 3
        %v1021 = vpop.permute.xlu0 %1020
        %1022 = vrot.lane.b32.xlu0 %v320, 3
        %v1023 = vpop.permute.xlu0 %1022
        %1024 = vrot.lane.b32.xlu0 %v321, 3
        %v1025 = vpop.permute.xlu0 %1024
        %1026 = vrot.lane.b32.xlu0 %v322, 3
        %v1027 = vpop.permute.xlu0 %1026
        %1028 = vrot.lane.b32.xlu0 %v323, 3
        %v1029 = vpop.permute.xlu0 %1028
        %1030 = vrot.lane.b32.xlu0 %v324, 3
        %v1031 = vpop.permute.xlu0 %1030
        %1032 = vrot.lane.b32.xlu0 %v325, 3
        %v1033 = vpop.permute.xlu0 %1032
        %1042 = vrot.lane.b32.xlu0 %v326, 6
        %v1043 = vpop.permute.xlu0 %1042
        %1044 = vrot.lane.b32.xlu0 %v327, 6
        %v1045 = vpop.permute.xlu0 %1044
        %1046 = vrot.lane.b32.xlu0 %v328, 6
        %v1047 = vpop.permute.xlu0 %1046
        %1048 = vrot.lane.b32.xlu0 %v329, 6
        %v1049 = vpop.permute.xlu0 %1048
        %1050 = vrot.lane.b32.xlu0 %v330, 6
        %v1051 = vpop.permute.xlu0 %1050
        %1052 = vrot.lane.b32.xlu0 %v331, 6
        %v1053 = vpop.permute.xlu0 %1052
        %1054 = vrot.lane.b32.xlu0 %v332, 6
        %v1055 = vpop.permute.xlu0 %1054
        %1056 = vrot.lane.b32.xlu0 %v333, 6
        %v1057 = vpop.permute.xlu0 %1056
        %1066 = vrot.lane.b32.xlu0 %v335, 9
        %v1067 = vpop.permute.xlu0 %1066
        %1068 = vrot.lane.b32.xlu0 %v336, 9
        %v1069 = vpop.permute.xlu0 %1068
        %1070 = vrot.lane.b32.xlu0 %v337, 9
        %v1071 = vpop.permute.xlu0 %1070
        %1072 = vrot.lane.b32.xlu0 %v338, 9
        %v1073 = vpop.permute.xlu0 %1072
        %1074 = vrot.lane.b32.xlu0 %v339, 9
        %v1075 = vpop.permute.xlu0 %1074
        %1076 = vrot.lane.b32.xlu0 %v340, 9
        %v1077 = vpop.permute.xlu0 %1076
        %1078 = vrot.lane.b32.xlu0 %v341, 9
        %v1079 = vpop.permute.xlu0 %1078
        %1080 = vrot.lane.b32.xlu0 %v342, 9
        %v1081 = vpop.permute.xlu0 %1080
        %1090 = vrot.lane.b32.xlu0 %v344, 12
        %v1091 = vpop.permute.xlu0 %1090
        %1092 = vrot.lane.b32.xlu0 %v345, 12
        %v1093 = vpop.permute.xlu0 %1092
        %1094 = vrot.lane.b32.xlu0 %v346, 12
        %v1095 = vpop.permute.xlu0 %1094
        %1096 = vrot.lane.b32.xlu0 %v347, 12
        %v1097 = vpop.permute.xlu0 %1096
        %1098 = vrot.lane.b32.xlu0 %v348, 12
        %v1099 = vpop.permute.xlu0 %1098
        %1100 = vrot.lane.b32.xlu0 %v349, 12
        %v1101 = vpop.permute.xlu0 %1100
        %1102 = vrot.lane.b32.xlu0 %v350, 12
        %v1103 = vpop.permute.xlu0 %1102
        %1104 = vrot.lane.b32.xlu0 %v351, 12
        %v1105 = vpop.permute.xlu0 %1104
        %1114 = vrot.lane.b32.xlu0 %v352, 15
        %v1115 = vpop.permute.xlu0 %1114
        %1116 = vrot.lane.b32.xlu0 %v353, 15
        %v1117 = vpop.permute.xlu0 %1116
        %1118 = vrot.lane.b32.xlu0 %v354, 15
        %v1119 = vpop.permute.xlu0 %1118
        %1120 = vrot.lane.b32.xlu0 %v355, 15
        %v1121 = vpop.permute.xlu0 %1120
        %1122 = vrot.lane.b32.xlu0 %v356, 15
        %v1123 = vpop.permute.xlu0 %1122
        %1124 = vrot.lane.b32.xlu0 %v357, 15
        %v1125 = vpop.permute.xlu0 %1124
        %1126 = vrot.lane.b32.xlu0 %v358, 15
        %v1127 = vpop.permute.xlu0 %1126
        %1128 = vrot.lane.b32.xlu0 %v359, 15
        %v1129 = vpop.permute.xlu0 %1128
        %1146 = vrot.lane.b32.xlu0 %v993, 18
        %v1147 = vpop.permute.xlu0 %1146
        %1148 = vrot.lane.b32.xlu0 %v994, 18
        %v1149 = vpop.permute.xlu0 %1148
        %1150 = vrot.lane.b32.xlu0 %v995, 18
        %v1151 = vpop.permute.xlu0 %1150
        %1152 = vrot.lane.b32.xlu0 %v996, 18
        %v1153 = vpop.permute.xlu0 %1152
        %1154 = vrot.lane.b32.xlu0 %v997, 18
        %v1155 = vpop.permute.xlu0 %1154
        %1156 = vrot.lane.b32.xlu0 %v998, 18
        %v1157 = vpop.permute.xlu0 %1156
        %1158 = vrot.lane.b32.xlu0 %v999, 18
        %v1159 = vpop.permute.xlu0 %1158
        %1160 = vrot.lane.b32.xlu0 %v1000, 18
        %v1161 = vpop.permute.xlu0 %1160
        %1178 = vrot.lane.b32.xlu0 %v1002, 21
        %v1179 = vpop.permute.xlu0 %1178
        %1180 = vrot.lane.b32.xlu0 %v1003, 21
        %v1181 = vpop.permute.xlu0 %1180
        %1182 = vrot.lane.b32.xlu0 %v1004, 21
        %v1183 = vpop.permute.xlu0 %1182
        %1184 = vrot.lane.b32.xlu0 %v1005, 21
        %v1185 = vpop.permute.xlu0 %1184
        %1186 = vrot.lane.b32.xlu0 %v1006, 21
        %v1187 = vpop.permute.xlu0 %1186
        %1188 = vrot.lane.b32.xlu0 %v1007, 21
        %v1189 = vpop.permute.xlu0 %1188
        %1190 = vrot.lane.b32.xlu0 %v1008, 21
        %v1191 = vpop.permute.xlu0 %1190
        %1192 = vrot.lane.b32.xlu0 %v1009, 21
        %v1193 = vpop.permute.xlu0 %1192
        %1210 = vrot.lane.b32.xlu0 %v1010, 24
        %v1211 = vpop.permute.xlu0 %1210
        %1212 = vrot.lane.b32.xlu0 %v1011, 24
        %v1213 = vpop.permute.xlu0 %1212
        %1214 = vrot.lane.b32.xlu0 %v1012, 24
        %v1215 = vpop.permute.xlu0 %1214
        %1216 = vrot.lane.b32.xlu0 %v1013, 24
        %v1217 = vpop.permute.xlu0 %1216
        %1218 = vrot.lane.b32.xlu0 %v1014, 24
        %v1219 = vpop.permute.xlu0 %1218
        %1220 = vrot.lane.b32.xlu0 %v1015, 24
        %v1221 = vpop.permute.xlu0 %1220
        %1222 = vrot.lane.b32.xlu0 %v1016, 24
        %v1223 = vpop.permute.xlu0 %1222
        %1224 = vrot.lane.b32.xlu0 %v1017, 24
        %v1225 = vpop.permute.xlu0 %1224
        %v1234 = vsel %vm616, %v309, %v1019
        %v1235 = vsel %vm616, %v310, %v1021
        %v1236 = vsel %vm616, %v311, %v1023
        %v1237 = vsel %vm616, %v312, %v1025
        %v1238 = vsel %vm616, %v313, %v1027
        %v1239 = vsel %vm616, %v314, %v1029
        %v1240 = vsel %vm616, %v315, %v1031
        %v1241 = vsel %vm616, %v316, %v1033
        %v1242 = vsel %vm625, %v1234, %v1043
        %v1243 = vsel %vm625, %v1235, %v1045
        %v1244 = vsel %vm625, %v1236, %v1047
        %v1245 = vsel %vm625, %v1237, %v1049
        %v1246 = vsel %vm625, %v1238, %v1051
        %v1247 = vsel %vm625, %v1239, %v1053
        %v1248 = vsel %vm625, %v1240, %v1055
        %v1249 = vsel %vm625, %v1241, %v1057
        %v1250 = vsel %vm634, %v1242, %v1067
        %v1251 = vsel %vm634, %v1243, %v1069
        %v1252 = vsel %vm634, %v1244, %v1071
        %v1253 = vsel %vm634, %v1245, %v1073
        %v1254 = vsel %vm634, %v1246, %v1075
        %v1255 = vsel %vm634, %v1247, %v1077
        %v1256 = vsel %vm634, %v1248, %v1079
        %v1257 = vsel %vm634, %v1249, %v1081
        %v1258 = vsel %vm643, %v1250, %v1091
        %v1259 = vsel %vm643, %v1251, %v1093
        %v1260 = vsel %vm643, %v1252, %v1095
        %v1261 = vsel %vm643, %v1253, %v1097
        %v1262 = vsel %vm643, %v1254, %v1099
        %v1263 = vsel %vm643, %v1255, %v1101
        %v1264 = vsel %vm643, %v1256, %v1103
        %v1265 = vsel %vm643, %v1257, %v1105
        %v1266 = vsel %vm652, %v1258, %v1115
        %v1267 = vsel %vm652, %v1259, %v1117
        %v1268 = vsel %vm652, %v1260, %v1119
        %v1269 = vsel %vm652, %v1261, %v1121
        %v1270 = vsel %vm652, %v1262, %v1123
        %v1271 = vsel %vm652, %v1263, %v1125
        %v1272 = vsel %vm652, %v1264, %v1127
        %v1273 = vsel %vm652, %v1265, %v1129
        %v1274 = vsel %vm661, %v1266, %v1147
        %v1275 = vsel %vm661, %v1267, %v1149
        %v1276 = vsel %vm661, %v1268, %v1151
        %v1277 = vsel %vm661, %v1269, %v1153
        %v1278 = vsel %vm661, %v1270, %v1155
        %v1279 = vsel %vm661, %v1271, %v1157
        %v1280 = vsel %vm661, %v1272, %v1159
        %v1281 = vsel %vm661, %v1273, %v1161
        %v1282 = vsel %vm670, %v1274, %v1179
        %v1283 = vsel %vm670, %v1275, %v1181
        %v1284 = vsel %vm670, %v1276, %v1183
        %v1285 = vsel %vm670, %v1277, %v1185
        %v1286 = vsel %vm670, %v1278, %v1187
        %v1287 = vsel %vm670, %v1279, %v1189
        %v1288 = vsel %vm670, %v1280, %v1191
        %v1289 = vsel %vm670, %v1281, %v1193
        %v1290 = vsel %vm679, %v1282, %v1211
        %v1291 = vsel %vm679, %v1283, %v1213
        %v1292 = vsel %vm679, %v1284, %v1215
        %v1293 = vsel %vm679, %v1285, %v1217
        %v1294 = vsel %vm679, %v1286, %v1219
        %v1295 = vsel %vm679, %v1287, %v1221
        %v1296 = vsel %vm679, %v1288, %v1223
        %v1297 = vsel %vm679, %v1289, %v1225
        %v1298 = vld [vmem:[%s1001 + $0x1] sm:$0xff]
        %v1299 = vld [vmem:[%s1001 + $0x11] sm:$0xff]
        %v1300 = vld [vmem:[%s1001 + $0x21] sm:$0xff]
        %v1301 = vld [vmem:[%s1001 + $0x31] sm:$0xff]
        %v1302 = vld [vmem:[%s1001 + $0x41] sm:$0xff]
        %v1303 = vld [vmem:[%s1001 + $0x51] sm:$0xff]
        %v1304 = vld [vmem:[%s1001 + $0x61] sm:$0xff]
        %v1305 = vld [vmem:[%s1001 + $0x71] sm:$0xff]
        %1306 = vrot.lane.b32.xlu0 %v326, 3
        %v1307 = vpop.permute.xlu0 %1306
        %1308 = vrot.lane.b32.xlu0 %v327, 3
        %v1309 = vpop.permute.xlu0 %1308
        %1310 = vrot.lane.b32.xlu0 %v328, 3
        %v1311 = vpop.permute.xlu0 %1310
        %1312 = vrot.lane.b32.xlu0 %v329, 3
        %v1313 = vpop.permute.xlu0 %1312
        %1314 = vrot.lane.b32.xlu0 %v330, 3
        %v1315 = vpop.permute.xlu0 %1314
        %1316 = vrot.lane.b32.xlu0 %v331, 3
        %v1317 = vpop.permute.xlu0 %1316
        %1318 = vrot.lane.b32.xlu0 %v332, 3
        %v1319 = vpop.permute.xlu0 %1318
        %1320 = vrot.lane.b32.xlu0 %v333, 3
        %v1321 = vpop.permute.xlu0 %1320
        %1330 = vrot.lane.b32.xlu0 %v696, 6
        %v1331 = vpop.permute.xlu0 %1330
        %1332 = vrot.lane.b32.xlu0 %v697, 6
        %v1333 = vpop.permute.xlu0 %1332
        %1334 = vrot.lane.b32.xlu0 %v698, 6
        %v1335 = vpop.permute.xlu0 %1334
        %1336 = vrot.lane.b32.xlu0 %v699, 6
        %v1337 = vpop.permute.xlu0 %1336
        %1338 = vrot.lane.b32.xlu0 %v700, 6
        %v1339 = vpop.permute.xlu0 %1338
        %1340 = vrot.lane.b32.xlu0 %v701, 6
        %v1341 = vpop.permute.xlu0 %1340
        %1342 = vrot.lane.b32.xlu0 %v702, 6
        %v1343 = vpop.permute.xlu0 %1342
        %1344 = vrot.lane.b32.xlu0 %v703, 6
        %v1345 = vpop.permute.xlu0 %1344
        %1354 = vrot.lane.b32.xlu0 %v344, 9
        %v1355 = vpop.permute.xlu0 %1354
        %1356 = vrot.lane.b32.xlu0 %v345, 9
        %v1357 = vpop.permute.xlu0 %1356
        %1358 = vrot.lane.b32.xlu0 %v346, 9
        %v1359 = vpop.permute.xlu0 %1358
        %1360 = vrot.lane.b32.xlu0 %v347, 9
        %v1361 = vpop.permute.xlu0 %1360
        %1362 = vrot.lane.b32.xlu0 %v348, 9
        %v1363 = vpop.permute.xlu0 %1362
        %1364 = vrot.lane.b32.xlu0 %v349, 9
        %v1365 = vpop.permute.xlu0 %1364
        %1366 = vrot.lane.b32.xlu0 %v350, 9
        %v1367 = vpop.permute.xlu0 %1366
        %1368 = vrot.lane.b32.xlu0 %v351, 9
        %v1369 = vpop.permute.xlu0 %1368
        %1378 = vrot.lane.b32.xlu0 %v352, 12
        %v1379 = vpop.permute.xlu0 %1378
        %1380 = vrot.lane.b32.xlu0 %v353, 12
        %v1381 = vpop.permute.xlu0 %1380
        %1382 = vrot.lane.b32.xlu0 %v354, 12
        %v1383 = vpop.permute.xlu0 %1382
        %1384 = vrot.lane.b32.xlu0 %v355, 12
        %v1385 = vpop.permute.xlu0 %1384
        %1386 = vrot.lane.b32.xlu0 %v356, 12
        %v1387 = vpop.permute.xlu0 %1386
        %1388 = vrot.lane.b32.xlu0 %v357, 12
        %v1389 = vpop.permute.xlu0 %1388
        %1390 = vrot.lane.b32.xlu0 %v358, 12
        %v1391 = vpop.permute.xlu0 %1390
        %1392 = vrot.lane.b32.xlu0 %v359, 12
        %v1393 = vpop.permute.xlu0 %1392
        %1402 = vrot.lane.b32.xlu0 %v704, 15
        %v1403 = vpop.permute.xlu0 %1402
        %1404 = vrot.lane.b32.xlu0 %v705, 15
        %v1405 = vpop.permute.xlu0 %1404
        %1406 = vrot.lane.b32.xlu0 %v706, 15
        %v1407 = vpop.permute.xlu0 %1406
        %1408 = vrot.lane.b32.xlu0 %v707, 15
        %v1409 = vpop.permute.xlu0 %1408
        %1410 = vrot.lane.b32.xlu0 %v708, 15
        %v1411 = vpop.permute.xlu0 %1410
        %1412 = vrot.lane.b32.xlu0 %v709, 15
        %v1413 = vpop.permute.xlu0 %1412
        %1414 = vrot.lane.b32.xlu0 %v710, 15
        %v1415 = vpop.permute.xlu0 %1414
        %1416 = vrot.lane.b32.xlu0 %v711, 15
        %v1417 = vpop.permute.xlu0 %1416
        %1426 = vrot.lane.b32.xlu0 %v1002, 18
        %v1427 = vpop.permute.xlu0 %1426
        %1428 = vrot.lane.b32.xlu0 %v1003, 18
        %v1429 = vpop.permute.xlu0 %1428
        %1430 = vrot.lane.b32.xlu0 %v1004, 18
        %v1431 = vpop.permute.xlu0 %1430
        %1432 = vrot.lane.b32.xlu0 %v1005, 18
        %v1433 = vpop.permute.xlu0 %1432
        %1434 = vrot.lane.b32.xlu0 %v1006, 18
        %v1435 = vpop.permute.xlu0 %1434
        %1436 = vrot.lane.b32.xlu0 %v1007, 18
        %v1437 = vpop.permute.xlu0 %1436
        %1438 = vrot.lane.b32.xlu0 %v1008, 18
        %v1439 = vpop.permute.xlu0 %1438
        %1440 = vrot.lane.b32.xlu0 %v1009, 18
        %v1441 = vpop.permute.xlu0 %1440
        %1450 = vrot.lane.b32.xlu0 %v1010, 21
        %v1451 = vpop.permute.xlu0 %1450
        %1452 = vrot.lane.b32.xlu0 %v1011, 21
        %v1453 = vpop.permute.xlu0 %1452
        %1454 = vrot.lane.b32.xlu0 %v1012, 21
        %v1455 = vpop.permute.xlu0 %1454
        %1456 = vrot.lane.b32.xlu0 %v1013, 21
        %v1457 = vpop.permute.xlu0 %1456
        %1458 = vrot.lane.b32.xlu0 %v1014, 21
        %v1459 = vpop.permute.xlu0 %1458
        %1460 = vrot.lane.b32.xlu0 %v1015, 21
        %v1461 = vpop.permute.xlu0 %1460
        %1462 = vrot.lane.b32.xlu0 %v1016, 21
        %v1463 = vpop.permute.xlu0 %1462
        %1464 = vrot.lane.b32.xlu0 %v1017, 21
        %v1465 = vpop.permute.xlu0 %1464
        %1482 = vrot.lane.b32.xlu0 %v1298, 24
        %v1483 = vpop.permute.xlu0 %1482
        %1484 = vrot.lane.b32.xlu0 %v1299, 24
        %v1485 = vpop.permute.xlu0 %1484
        %1486 = vrot.lane.b32.xlu0 %v1300, 24
        %v1487 = vpop.permute.xlu0 %1486
        %1488 = vrot.lane.b32.xlu0 %v1301, 24
        %v1489 = vpop.permute.xlu0 %1488
        %1490 = vrot.lane.b32.xlu0 %v1302, 24
        %v1491 = vpop.permute.xlu0 %1490
        %1492 = vrot.lane.b32.xlu0 %v1303, 24
        %v1493 = vpop.permute.xlu0 %1492
        %1494 = vrot.lane.b32.xlu0 %v1304, 24
        %v1495 = vpop.permute.xlu0 %1494
        %1496 = vrot.lane.b32.xlu0 %v1305, 24
        %v1497 = vpop.permute.xlu0 %1496
        %v1506 = vsel %vm616, %v318, %v1307
        %v1507 = vsel %vm616, %v319, %v1309
        %v1508 = vsel %vm616, %v320, %v1311
        %v1509 = vsel %vm616, %v321, %v1313
        %v1510 = vsel %vm616, %v322, %v1315
        %v1511 = vsel %vm616, %v323, %v1317
        %v1512 = vsel %vm616, %v324, %v1319
        %v1513 = vsel %vm616, %v325, %v1321
        %v1514 = vsel %vm625, %v1506, %v1331
        %v1515 = vsel %vm625, %v1507, %v1333
        %v1516 = vsel %vm625, %v1508, %v1335
        %v1517 = vsel %vm625, %v1509, %v1337
        %v1518 = vsel %vm625, %v1510, %v1339
        %v1519 = vsel %vm625, %v1511, %v1341
        %v1520 = vsel %vm625, %v1512, %v1343
        %v1521 = vsel %vm625, %v1513, %v1345
        %v1522 = vsel %vm634, %v1514, %v1355
        %v1523 = vsel %vm634, %v1515, %v1357
        %v1524 = vsel %vm634, %v1516, %v1359
        %v1525 = vsel %vm634, %v1517, %v1361
        %v1526 = vsel %vm634, %v1518, %v1363
        %v1527 = vsel %vm634, %v1519, %v1365
        %v1528 = vsel %vm634, %v1520, %v1367
        %v1529 = vsel %vm634, %v1521, %v1369
        %v1530 = vsel %vm643, %v1522, %v1379
        %v1531 = vsel %vm643, %v1523, %v1381
        %v1532 = vsel %vm643, %v1524, %v1383
        %v1533 = vsel %vm643, %v1525, %v1385
        %v1534 = vsel %vm643, %v1526, %v1387
        %v1535 = vsel %vm643, %v1527, %v1389
        %v1536 = vsel %vm643, %v1528, %v1391
        %v1537 = vsel %vm643, %v1529, %v1393
        %v1538 = vsel %vm652, %v1530, %v1403
        %v1539 = vsel %vm652, %v1531, %v1405
        %v1540 = vsel %vm652, %v1532, %v1407
        %v1541 = vsel %vm652, %v1533, %v1409
        %v1542 = vsel %vm652, %v1534, %v1411
        %v1543 = vsel %vm652, %v1535, %v1413
        %v1544 = vsel %vm652, %v1536, %v1415
        %v1545 = vsel %vm652, %v1537, %v1417
        %v1546 = vsel %vm661, %v1538, %v1427
        %v1547 = vsel %vm661, %v1539, %v1429
        %v1548 = vsel %vm661, %v1540, %v1431
        %v1549 = vsel %vm661, %v1541, %v1433
        %v1550 = vsel %vm661, %v1542, %v1435
        %v1551 = vsel %vm661, %v1543, %v1437
        %v1552 = vsel %vm661, %v1544, %v1439
        %v1553 = vsel %vm661, %v1545, %v1441
        %v1554 = vsel %vm670, %v1546, %v1451
        %v1555 = vsel %vm670, %v1547, %v1453
        %v1556 = vsel %vm670, %v1548, %v1455
        %v1557 = vsel %vm670, %v1549, %v1457
        %v1558 = vsel %vm670, %v1550, %v1459
        %v1559 = vsel %vm670, %v1551, %v1461
        %v1560 = vsel %vm670, %v1552, %v1463
        %v1561 = vsel %vm670, %v1553, %v1465
        %v1562 = vsel %vm679, %v1554, %v1483
        %v1563 = vsel %vm679, %v1555, %v1485
        %v1564 = vsel %vm679, %v1556, %v1487
        %v1565 = vsel %vm679, %v1557, %v1489
        %v1566 = vsel %vm679, %v1558, %v1491
        %v1567 = vsel %vm679, %v1559, %v1493
        %v1568 = vsel %vm679, %v1560, %v1495
        %v1569 = vsel %vm679, %v1561, %v1497
        %v1570 = vpack.c.bf16 %v681, %v680
        %v1571 = vpack.c.bf16 %v683, %v682
        %v1572 = vpack.c.bf16 %v685, %v684
        %v1573 = vpack.c.bf16 %v687, %v686
        %v1574 = vpack.c.bf16 %v985, %v984
        %v1575 = vpack.c.bf16 %v987, %v986
        %v1576 = vpack.c.bf16 %v989, %v988
        %v1577 = vpack.c.bf16 %v991, %v990
        %v1578 = vpack.c.bf16 %v1291, %v1290
        %v1579 = vpack.c.bf16 %v1293, %v1292
        %v1580 = vpack.c.bf16 %v1295, %v1294
        %v1581 = vpack.c.bf16 %v1297, %v1296
        %v1582 = vpack.c.bf16 %v1563, %v1562
        %v1583 = vpack.c.bf16 %v1565, %v1564
        %v1584 = vpack.c.bf16 %v1567, %v1566
        %v1585 = vpack.c.bf16 %v1569, %v1568
        %v1586 = vld [vmem:[%s1] sm:$0xf]
        %v1587 = vld [vmem:[%s1 + $0x4] sm:$0xf]
        %v1588 = vld [vmem:[%s1 + $0x8] sm:$0xf]
        %v1589 = vld [vmem:[%s1 + $0xc] sm:$0x3]
        %v1590 = vld [vmem:[%s2] sm:$0x1]
        %v1592 = vlaneseq
        %v1593 = vshrl.u32 %v1592, 7
        %v1594 = vsub.s32 0, %v1593
        %v1595 = vrot.slane %v1590, %v1594
        %v1601 = vunpack.c.l.b16 %v1586
        %v1602 = vunpack.c.l.b16 %v1587
        %v1603 = vunpack.c.l.b16 %v1588
        %v1604 = vunpack.c.l.b16 %v1589
        %v1605 = vpack.c.b16 %v1602, %v1601
        %v1606 = vpack.c.b16 %v1604, %v1603
        %vm1608 = vcmask 220160
        %v1610 = vsel %vm1608, %v1570, 0
        %v1613 = vsel %vm1608, %v1571, 0
        %v1616 = vsel %vm1608, %v1572, 0
        %v1619 = vsel %vm1608, %v1573, 0
        %v1622 = vsel %vm1608, %v1574, 0
        %v1625 = vsel %vm1608, %v1575, 0
        %v1628 = vsel %vm1608, %v1576, 0
        %v1631 = vsel %vm1608, %v1577, 0
        %v1634 = vsel %vm1608, %v1578, 0
        %v1637 = vsel %vm1608, %v1579, 0
        %v1640 = vsel %vm1608, %v1580, 0
        %v1643 = vsel %vm1608, %v1581, 0
        %v1646 = vsel %vm1608, %v1582, 0
        %v1649 = vsel %vm1608, %v1583, 0
        %v1652 = vsel %vm1608, %v1584, 0
        %v1655 = vsel %vm1608, %v1585, 0
        %vm1657 = vcmask 1044480
        %vm1658 = vcmask 1045504
        %v1659 = vsel %vm1657, 4294967295, 65535
        %v1660 = vsel %vm1658, %v1659, 0
        %v1662 = vand.u32 %v1606, %v1660
        %1664 = vmatprep.subr.bf16.mxu0 0
        %1665 = vmatpush1.bf16.msra.mxu0 %v1605
        %1666 = vmatprep.subr.bf16.mxu0 0
        %1667 = vmatpush1.bf16.msra.mxu0 %v1662
        %1668 = vmatprep.subr.bf16.mxu0 0
        %1669 = vmatpush1.bf16.msra.mxu0 0
        %1670 = vmatprep.subr.bf16.mxu0 0
        %1671 = vmatpush1.bf16.msra.mxu0 0
        %1672 = vmatprep.subr.bf16.mxu0 0
        %1673 = vmatpush1.bf16.msra.mxu0 0
        %1674 = vmatprep.subr.bf16.mxu0 0
        %1675 = vmatpush1.bf16.msra.mxu0 0
        %1676 = vmatprep.subr.bf16.mxu0 0
        %1677 = vmatpush1.bf16.msra.mxu0 0
        %1678 = vmatprep.subr.bf16.mxu0 0
        %1679 = vmatpush1.bf16.msra.mxu0 0
        %1680 = vmatprep.subr.bf16.mxu0 0
        %1681 = vmatpush1.bf16.msra.mxu0 0
        %1682 = vmatprep.subr.bf16.mxu0 0
        %1683 = vmatpush1.bf16.msra.mxu0 0
        %1684 = vmatprep.subr.bf16.mxu0 0
        %1685 = vmatpush1.bf16.msra.mxu0 0
        %1686 = vmatprep.subr.bf16.mxu0 0
        %1687 = vmatpush1.bf16.msra.mxu0 0
        %1688 = vmatprep.subr.bf16.mxu0 0
        %1689 = vmatpush1.bf16.msra.mxu0 0
        %1690 = vmatprep.subr.bf16.mxu0 0
        %1691 = vmatpush1.bf16.msra.mxu0 0
        %1692 = vmatprep.subr.bf16.mxu0 0
        %1693 = vmatpush1.bf16.msra.mxu0 0
        %1694 = vmatprep.subr.bf16.mxu0 0
        %1695 = vmatpush1.bf16.msra.mxu0 0
        %1696 = vmatprep.mubr.bf16.mxu0 0
        %1697 = vmatmul.mubr.bf16.gmra.mrb[0].mxu0 %v1610
        %v1698 = vpop.f32.mrb[0].mxu0
        %v1699 = vadd.f32 %v1595, %v1698
        %v1700 = vpop.f32.mrb[0].mxu0
        %v1701 = vpop.f32.mrb[0].mxu0
        %v1702 = vadd.f32 %v1595, %v1701
        %v1703 = vpop.f32.mrb[0].mxu0
        %1704 = vmatprep.mubr.bf16.mxu0 0
        %1705 = vmatmul.mubr.bf16.gmra.mrb[0].mxu0 %v1613
        %v1706 = vpop.f32.mrb[0].mxu0
        %v1707 = vadd.f32 %v1595, %v1706
        %v1708 = vpop.f32.mrb[0].mxu0
        %v1709 = vpop.f32.mrb[0].mxu0
        %v1710 = vadd.f32 %v1595, %v1709
        %v1711 = vpop.f32.mrb[0].mxu0
        %1712 = vmatprep.mubr.bf16.mxu0 0
        %1713 = vmatmul.mubr.bf16.gmra.mrb[0].mxu0 %v1616
        %v1714 = vpop.f32.mrb[0].mxu0
        %v1715 = vadd.f32 %v1595, %v1714
        %v1716 = vpop.f32.mrb[0].mxu0
        %v1717 = vpop.f32.mrb[0].mxu0
        %v1718 = vadd.f32 %v1595, %v1717
        %v1719 = vpop.f32.mrb[0].mxu0
        %1720 = vmatprep.mubr.bf16.mxu0 0
        %1721 = vmatmul.mubr.bf16.gmra.mrb[0].mxu0 %v1619
        %v1722 = vpop.f32.mrb[0].mxu0
        %v1723 = vadd.f32 %v1595, %v1722
        %v1724 = vpop.f32.mrb[0].mxu0
        %v1725 = vpop.f32.mrb[0].mxu0
        %v1726 = vadd.f32 %v1595, %v1725
        %v1727 = vpop.f32.mrb[0].mxu0
        %1728 = vmatprep.mubr.bf16.mxu0 0
        %1729 = vmatmul.mubr.bf16.gmra.mrb[0].mxu0 %v1622
        %v1730 = vpop.f32.mrb[0].mxu0
        %v1731 = vadd.f32 %v1595, %v1730
        %v1732 = vpop.f32.mrb[0].mxu0
        %v1733 = vpop.f32.mrb[0].mxu0
        %v1734 = vadd.f32 %v1595, %v1733
        %v1735 = vpop.f32.mrb[0].mxu0
        %1736 = vmatprep.mubr.bf16.mxu0 0
        %1737 = vmatmul.mubr.bf16.gmra.mrb[0].mxu0 %v1625
        %v1738 = vpop.f32.mrb[0].mxu0
        %v1739 = vadd.f32 %v1595, %v1738
        %v1740 = vpop.f32.mrb[0].mxu0
        %v1741 = vpop.f32.mrb[0].mxu0
        %v1742 = vadd.f32 %v1595, %v1741
        %v1743 = vpop.f32.mrb[0].mxu0
        %1744 = vmatprep.mubr.bf16.mxu0 0
        %1745 = vmatmul.mubr.bf16.gmra.mrb[0].mxu0 %v1628
        %v1746 = vpop.f32.mrb[0].mxu0
        %v1747 = vadd.f32 %v1595, %v1746
        %v1748 = vpop.f32.mrb[0].mxu0
        %v1749 = vpop.f32.mrb[0].mxu0
        %v1750 = vadd.f32 %v1595, %v1749
        %v1751 = vpop.f32.mrb[0].mxu0
        %1752 = vmatprep.mubr.bf16.mxu0 0
        %1753 = vmatmul.mubr.bf16.gmra.mrb[0].mxu0 %v1631
        %v1754 = vpop.f32.mrb[0].mxu0
        %v1755 = vadd.f32 %v1595, %v1754
        %v1756 = vpop.f32.mrb[0].mxu0
        %v1757 = vpop.f32.mrb[0].mxu0
        %v1758 = vadd.f32 %v1595, %v1757
        %v1759 = vpop.f32.mrb[0].mxu0
        %1760 = vmatprep.mubr.bf16.mxu0 0
        %1761 = vmatmul.mubr.bf16.gmra.mrb[0].mxu0 %v1634
        %v1762 = vpop.f32.mrb[0].mxu0
        %v1763 = vadd.f32 %v1595, %v1762
        %v1764 = vpop.f32.mrb[0].mxu0
        %v1765 = vpop.f32.mrb[0].mxu0
        %v1766 = vadd.f32 %v1595, %v1765
        %v1767 = vpop.f32.mrb[0].mxu0
        %1768 = vmatprep.mubr.bf16.mxu0 0
        %1769 = vmatmul.mubr.bf16.gmra.mrb[0].mxu0 %v1637
        %v1770 = vpop.f32.mrb[0].mxu0
        %v1771 = vadd.f32 %v1595, %v1770
        %v1772 = vpop.f32.mrb[0].mxu0
        %v1773 = vpop.f32.mrb[0].mxu0
        %v1774 = vadd.f32 %v1595, %v1773
        %v1775 = vpop.f32.mrb[0].mxu0
        %1776 = vmatprep.mubr.bf16.mxu0 0
        %1777 = vmatmul.mubr.bf16.gmra.mrb[0].mxu0 %v1640
        %v1778 = vpop.f32.mrb[0].mxu0
        %v1779 = vadd.f32 %v1595, %v1778
        %v1780 = vpop.f32.mrb[0].mxu0
        %v1781 = vpop.f32.mrb[0].mxu0
        %v1782 = vadd.f32 %v1595, %v1781
        %v1783 = vpop.f32.mrb[0].mxu0
        %1784 = vmatprep.mubr.bf16.mxu0 0
        %1785 = vmatmul.mubr.bf16.gmra.mrb[0].mxu0 %v1643
        %v1786 = vpop.f32.mrb[0].mxu0
        %v1787 = vadd.f32 %v1595, %v1786
        %v1788 = vpop.f32.mrb[0].mxu0
        %v1789 = vpop.f32.mrb[0].mxu0
        %v1790 = vadd.f32 %v1595, %v1789
        %v1791 = vpop.f32.mrb[0].mxu0
        %1792 = vmatprep.mubr.bf16.mxu0 0
        %1793 = vmatmul.mubr.bf16.gmra.mrb[0].mxu0 %v1646
        %v1794 = vpop.f32.mrb[0].mxu0
        %v1795 = vadd.f32 %v1595, %v1794
        %v1796 = vpop.f32.mrb[0].mxu0
        %v1797 = vpop.f32.mrb[0].mxu0
        %v1798 = vadd.f32 %v1595, %v1797
        %v1799 = vpop.f32.mrb[0].mxu0
        %1800 = vmatprep.mubr.bf16.mxu0 0
        %1801 = vmatmul.mubr.bf16.gmra.mrb[0].mxu0 %v1649
        %v1802 = vpop.f32.mrb[0].mxu0
        %v1803 = vadd.f32 %v1595, %v1802
        %v1804 = vpop.f32.mrb[0].mxu0
        %v1805 = vpop.f32.mrb[0].mxu0
        %v1806 = vadd.f32 %v1595, %v1805
        %v1807 = vpop.f32.mrb[0].mxu0
        %1808 = vmatprep.mubr.bf16.mxu0 0
        %1809 = vmatmul.mubr.bf16.gmra.mrb[0].mxu0 %v1652
        %v1810 = vpop.f32.mrb[0].mxu0
        %v1811 = vadd.f32 %v1595, %v1810
        %v1812 = vpop.f32.mrb[0].mxu0
        %v1813 = vpop.f32.mrb[0].mxu0
        %v1814 = vadd.f32 %v1595, %v1813
        %v1815 = vpop.f32.mrb[0].mxu0
        %1816 = vmatprep.mubr.bf16.mxu0 0
        %1817 = vmatmul.mubr.bf16.gmra.mrb[0].mxu0 %v1655
        %v1818 = vpop.f32.mrb[0].mxu0
        %v1819 = vadd.f32 %v1595, %v1818
        %v1820 = vpop.f32.mrb[0].mxu0
        %v1821 = vpop.f32.mrb[0].mxu0
        %v1822 = vadd.f32 %v1595, %v1821
        %v1823 = vpop.f32.mrb[0].mxu0
        %1824 = vdwg.mxu0
        %p1825 = scmp.eq.s32.totalorder %s23, 0
        %p1826 = scmp.eq.s32.totalorder %s24, 0
        %p1827 = pnand %p1825, %p1826
        %p1828 = pneg %p1827
        // Predicated region
        $region49: #{student_net5_forward.1} parent=47 // pred_check
          _
        $region50: #{student_net5_forward.1} parent=47 // pred_check_branch
          %1830 = sbr.rel (%p1827) target = $region52
        $region51: #{student_net5_forward.1} parent=47 // pred_region
          %vm1831 = vcmask 57344
          %1832 = vst.msk [vmem:[#allocation2] sm:$0x1] %vm1831, 0.0
          %1833 = vst.msk [vmem:[#allocation3] sm:$0x1] %vm1831, 0.0
          %vm1834 = vcmask 58368
          %1835 = vst.msk [vmem:[#allocation4] sm:$0x3] %vm1834, 0.0
        $region52: #{student_net5_forward.1} parent=47 // pred_fallthru
          _
        // Predicated region
        $region53: #{student_net5_forward.1} parent=47 // pred_check
          %p1836 = pneg %p1825
        $region54: #{student_net5_forward.1} parent=47 // pred_check_branch
          %1838 = sbr.rel (%p1836) target = $region56
        $region55: #{student_net5_forward.1} parent=47 // pred_region
          %v1839 = vld [vmem:[#allocation2] sm:$0x1]
          %vm1840 = vcmask 64512
          %v1841 = vsel %vm1840, %v1699, 0.0
          %v1842 = vsel %vm1840, %v1702, 0.0
          %v1843 = vadd.f32 %v1841, %v1842
          %v1844 = vsel %vm1840, %v1707, 0.0
          %v1845 = vadd.f32 %v1843, %v1844
          %v1846 = vsel %vm1840, %v1710, 0.0
          %v1847 = vadd.f32 %v1845, %v1846
          %v1848 = vsel %vm1840, %v1715, 0.0
          %v1849 = vadd.f32 %v1847, %v1848
          %v1850 = vsel %vm1840, %v1718, 0.0
          %v1851 = vadd.f32 %v1849, %v1850
          %v1852 = vsel %vm1840, %v1723, 0.0
          %v1853 = vadd.f32 %v1851, %v1852
          %v1854 = vsel %vm1840, %v1726, 0.0
          %v1855 = vadd.f32 %v1853, %v1854
          %v1856 = vsel %vm1840, %v1731, 0.0
          %v1857 = vadd.f32 %v1855, %v1856
          %v1858 = vsel %vm1840, %v1734, 0.0
          %v1859 = vadd.f32 %v1857, %v1858
          %v1860 = vsel %vm1840, %v1739, 0.0
          %v1861 = vadd.f32 %v1859, %v1860
          %v1862 = vsel %vm1840, %v1742, 0.0
          %v1863 = vadd.f32 %v1861, %v1862
          %v1864 = vsel %vm1840, %v1747, 0.0
          %v1865 = vadd.f32 %v1863, %v1864
          %v1866 = vsel %vm1840, %v1750, 0.0
          %v1867 = vadd.f32 %v1865, %v1866
          %v1868 = vsel %vm1840, %v1755, 0.0
          %v1869 = vadd.f32 %v1867, %v1868
          %v1870 = vsel %vm1840, %v1758, 0.0
          %v1871 = vadd.f32 %v1869, %v1870
          %v1872 = vsel %vm1840, %v1763, 0.0
          %v1873 = vadd.f32 %v1871, %v1872
          %v1874 = vsel %vm1840, %v1766, 0.0
          %v1875 = vadd.f32 %v1873, %v1874
          %v1876 = vsel %vm1840, %v1771, 0.0
          %v1877 = vadd.f32 %v1875, %v1876
          %v1878 = vsel %vm1840, %v1774, 0.0
          %v1879 = vadd.f32 %v1877, %v1878
          %v1880 = vsel %vm1840, %v1779, 0.0
          %v1881 = vadd.f32 %v1879, %v1880
          %v1882 = vsel %vm1840, %v1782, 0.0
          %v1883 = vadd.f32 %v1881, %v1882
          %v1884 = vsel %vm1840, %v1787, 0.0
          %v1885 = vadd.f32 %v1883, %v1884
          %v1886 = vsel %vm1840, %v1790, 0.0
          %v1887 = vadd.f32 %v1885, %v1886
          %v1888 = vsel %vm1840, %v1795, 0.0
          %v1889 = vadd.f32 %v1887, %v1888
          %v1890 = vsel %vm1840, %v1798, 0.0
          %v1891 = vadd.f32 %v1889, %v1890
          %v1892 = vsel %vm1840, %v1803, 0.0
          %v1893 = vadd.f32 %v1891, %v1892
          %v1894 = vsel %vm1840, %v1806, 0.0
          %v1895 = vadd.f32 %v1893, %v1894
          %v1896 = vsel %vm1840, %v1811, 0.0
          %v1897 = vadd.f32 %v1895, %v1896
          %v1898 = vsel %vm1840, %v1814, 0.0
          %v1899 = vadd.f32 %v1897, %v1898
          %v1900 = vsel %vm1840, %v1819, 0.0
          %v1901 = vadd.f32 %v1899, %v1900
          %v1902 = vsel %vm1840, %v1822, 0.0
          %v1903 = vadd.f32 %v1901, %v1902
          %v1904 = vrot.slane %v1903, 4
          %v1905 = vadd.f32 %v1903, %v1904
          %v1906 = vrot.slane %v1905, 2
          %v1907 = vadd.f32 %v1905, %v1906
          %v1908 = vrot.slane %v1907, 1
          %v1909 = vadd.f32 %v1907, %v1908
          %v1910 = vadd.f32 %v1839, %v1909
          %vm1911 = vcmask 57344
          %1912 = vst.msk [vmem:[#allocation2] sm:$0x1] %vm1911, %v1910
          %v1913 = vld [vmem:[#allocation3] sm:$0x1]
          %v1914 = vmul.f32 %v1699, %v1699
          %v1915 = vmul.f32 %v1702, %v1702
          %v1916 = vmul.f32 %v1707, %v1707
          %v1917 = vmul.f32 %v1710, %v1710
          %v1918 = vmul.f32 %v1715, %v1715
          %v1919 = vmul.f32 %v1718, %v1718
          %v1920 = vmul.f32 %v1723, %v1723
          %v1921 = vmul.f32 %v1726, %v1726
          %v1922 = vmul.f32 %v1731, %v1731
          %v1923 = vmul.f32 %v1734, %v1734
          %v1924 = vmul.f32 %v1739, %v1739
          %v1925 = vmul.f32 %v1742, %v1742
          %v1926 = vmul.f32 %v1747, %v1747
          %v1927 = vmul.f32 %v1750, %v1750
          %v1928 = vmul.f32 %v1755, %v1755
          %v1929 = vmul.f32 %v1758, %v1758
          %v1930 = vmul.f32 %v1763, %v1763
          %v1931 = vmul.f32 %v1766, %v1766
          %v1932 = vmul.f32 %v1771, %v1771
          %v1933 = vmul.f32 %v1774, %v1774
          %v1934 = vmul.f32 %v1779, %v1779
          %v1935 = vmul.f32 %v1782, %v1782
          %v1936 = vmul.f32 %v1787, %v1787
          %v1937 = vmul.f32 %v1790, %v1790
          %v1938 = vmul.f32 %v1795, %v1795
          %v1939 = vmul.f32 %v1798, %v1798
          %v1940 = vmul.f32 %v1803, %v1803
          %v1941 = vmul.f32 %v1806, %v1806
          %v1942 = vmul.f32 %v1811, %v1811
          %v1943 = vmul.f32 %v1814, %v1814
          %v1944 = vmul.f32 %v1819, %v1819
          %v1945 = vmul.f32 %v1822, %v1822
          %v1946 = vsel %vm1840, %v1914, 0.0
          %v1947 = vsel %vm1840, %v1915, 0.0
          %v1948 = vadd.f32 %v1946, %v1947
          %v1949 = vsel %vm1840, %v1916, 0.0
          %v1950 = vadd.f32 %v1948, %v1949
          %v1951 = vsel %vm1840, %v1917, 0.0
          %v1952 = vadd.f32 %v1950, %v1951
          %v1953 = vsel %vm1840, %v1918, 0.0
          %v1954 = vadd.f32 %v1952, %v1953
          %v1955 = vsel %vm1840, %v1919, 0.0
          %v1956 = vadd.f32 %v1954, %v1955
          %v1957 = vsel %vm1840, %v1920, 0.0
          %v1958 = vadd.f32 %v1956, %v1957
          %v1959 = vsel %vm1840, %v1921, 0.0
          %v1960 = vadd.f32 %v1958, %v1959
          %v1961 = vsel %vm1840, %v1922, 0.0
          %v1962 = vadd.f32 %v1960, %v1961
          %v1963 = vsel %vm1840, %v1923, 0.0
          %v1964 = vadd.f32 %v1962, %v1963
          %v1965 = vsel %vm1840, %v1924, 0.0
          %v1966 = vadd.f32 %v1964, %v1965
          %v1967 = vsel %vm1840, %v1925, 0.0
          %v1968 = vadd.f32 %v1966, %v1967
          %v1969 = vsel %vm1840, %v1926, 0.0
          %v1970 = vadd.f32 %v1968, %v1969
          %v1971 = vsel %vm1840, %v1927, 0.0
          %v1972 = vadd.f32 %v1970, %v1971
          %v1973 = vsel %vm1840, %v1928, 0.0
          %v1974 = vadd.f32 %v1972, %v1973
          %v1975 = vsel %vm1840, %v1929, 0.0
          %v1976 = vadd.f32 %v1974, %v1975
          %v1977 = vsel %vm1840, %v1930, 0.0
          %v1978 = vadd.f32 %v1976, %v1977
          %v1979 = vsel %vm1840, %v1931, 0.0
          %v1980 = vadd.f32 %v1978, %v1979
          %v1981 = vsel %vm1840, %v1932, 0.0
          %v1982 = vadd.f32 %v1980, %v1981
          %v1983 = vsel %vm1840, %v1933, 0.0
          %v1984 = vadd.f32 %v1982, %v1983
          %v1985 = vsel %vm1840, %v1934, 0.0
          %v1986 = vadd.f32 %v1984, %v1985
          %v1987 = vsel %vm1840, %v1935, 0.0
          %v1988 = vadd.f32 %v1986, %v1987
          %v1989 = vsel %vm1840, %v1936, 0.0
          %v1990 = vadd.f32 %v1988, %v1989
          %v1991 = vsel %vm1840, %v1937, 0.0
          %v1992 = vadd.f32 %v1990, %v1991
          %v1993 = vsel %vm1840, %v1938, 0.0
          %v1994 = vadd.f32 %v1992, %v1993
          %v1995 = vsel %vm1840, %v1939, 0.0
          %v1996 = vadd.f32 %v1994, %v1995
          %v1997 = vsel %vm1840, %v1940, 0.0
          %v1998 = vadd.f32 %v1996, %v1997
          %v1999 = vsel %vm1840, %v1941, 0.0
          %v2000 = vadd.f32 %v1998, %v1999
          %v2001 = vsel %vm1840, %v1942, 0.0
          %v2002 = vadd.f32 %v2000, %v2001
          %v2003 = vsel %vm1840, %v1943, 0.0
          %v2004 = vadd.f32 %v2002, %v2003
          %v2005 = vsel %vm1840, %v1944, 0.0
          %v2006 = vadd.f32 %v2004, %v2005
          %v2007 = vsel %vm1840, %v1945, 0.0
          %v2008 = vadd.f32 %v2006, %v2007
          %v2009 = vrot.slane %v2008, 4
          %v2010 = vadd.f32 %v2008, %v2009
          %v2011 = vrot.slane %v2010, 2
          %v2012 = vadd.f32 %v2010, %v2011
          %v2013 = vrot.slane %v2012, 1
          %v2014 = vadd.f32 %v2012, %v2013
          %v2015 = vadd.f32 %v1913, %v2014
          %2016 = vst.msk [vmem:[#allocation3] sm:$0x1] %vm1911, %v2015
        $region56: #{student_net5_forward.1} parent=47 // pred_fallthru
          _
        %p2017 = scmp.eq.s32.totalorder %s23, 1
        // Predicated region
        $region57: #{student_net5_forward.1} parent=47 // pred_check
          %p2018 = pneg %p2017
        $region58: #{student_net5_forward.1} parent=47 // pred_check_branch
          %2020 = sbr.rel (%p2018) target = $region60
        $region59: #{student_net5_forward.1} parent=47 // pred_region
          %v2021 = vld [vmem:[#allocation2] sm:$0x1]
          %v2022 = vmul.f32 %v2021, 0.001953125
          %v2023 = vld [vmem:[#allocation3] sm:$0x1]
          %v2024 = vmul.f32 %v2023, 0.001953125
          %v2025 = vmul.f32 %v2022, %v2022
          %v2026 = vsub.f32 %v2024, %v2025
          %v2027 = vld [vmem:[%s3] sm:$0x1]
          %v2028 = vadd.f32 %v2026, 1e-05
          %v2029 = vrsqrt.pop %v2028
          %v2030 = vmul.f32 %v2027, %v2029
          %v2031 = vld [vmem:[%s4] sm:$0x1]
          %v2032 = vmul.f32 %v2022, %v2030
          %v2033 = vsub.f32 %v2031, %v2032
          %v2035 = vlaneseq
          %v2036 = vshrl.u32 %v2035, 7
          %v2037 = vsub.s32 0, %v2036
          %v2038 = vrot.slane %v2030, %v2037
          %v2040 = vmul.f32 %v1699, %v2038
          %v2041 = vmul.f32 %v1702, %v2038
          %v2042 = vmul.f32 %v1707, %v2038
          %v2043 = vmul.f32 %v1710, %v2038
          %v2044 = vmul.f32 %v1715, %v2038
          %v2045 = vmul.f32 %v1718, %v2038
          %v2046 = vmul.f32 %v1723, %v2038
          %v2047 = vmul.f32 %v1726, %v2038
          %v2048 = vmul.f32 %v1731, %v2038
          %v2049 = vmul.f32 %v1734, %v2038
          %v2050 = vmul.f32 %v1739, %v2038
          %v2051 = vmul.f32 %v1742, %v2038
          %v2052 = vmul.f32 %v1747, %v2038
          %v2053 = vmul.f32 %v1750, %v2038
          %v2054 = vmul.f32 %v1755, %v2038
          %v2055 = vmul.f32 %v1758, %v2038
          %v2056 = vmul.f32 %v1763, %v2038
          %v2057 = vmul.f32 %v1766, %v2038
          %v2058 = vmul.f32 %v1771, %v2038
          %v2059 = vmul.f32 %v1774, %v2038
          %v2060 = vmul.f32 %v1779, %v2038
          %v2061 = vmul.f32 %v1782, %v2038
          %v2062 = vmul.f32 %v1787, %v2038
          %v2063 = vmul.f32 %v1790, %v2038
          %v2064 = vmul.f32 %v1795, %v2038
          %v2065 = vmul.f32 %v1798, %v2038
          %v2066 = vmul.f32 %v1803, %v2038
          %v2067 = vmul.f32 %v1806, %v2038
          %v2068 = vmul.f32 %v1811, %v2038
          %v2069 = vmul.f32 %v1814, %v2038
          %v2070 = vmul.f32 %v1819, %v2038
          %v2071 = vmul.f32 %v1822, %v2038
          %v2073 = vlaneseq
          %v2074 = vshrl.u32 %v2073, 7
          %v2075 = vsub.s32 0, %v2074
          %v2076 = vrot.slane %v2033, %v2075
          %v2078 = vadd.f32 %v2040, %v2076
          %v2079 = vadd.f32 %v2041, %v2076
          %v2080 = vadd.f32 %v2042, %v2076
          %v2081 = vadd.f32 %v2043, %v2076
          %v2082 = vadd.f32 %v2044, %v2076
          %v2083 = vadd.f32 %v2045, %v2076
          %v2084 = vadd.f32 %v2046, %v2076
          %v2085 = vadd.f32 %v2047, %v2076
          %v2086 = vadd.f32 %v2048, %v2076
          %v2087 = vadd.f32 %v2049, %v2076
          %v2088 = vadd.f32 %v2050, %v2076
          %v2089 = vadd.f32 %v2051, %v2076
          %v2090 = vadd.f32 %v2052, %v2076
          %v2091 = vadd.f32 %v2053, %v2076
          %v2092 = vadd.f32 %v2054, %v2076
          %v2093 = vadd.f32 %v2055, %v2076
          %v2094 = vadd.f32 %v2056, %v2076
          %v2095 = vadd.f32 %v2057, %v2076
          %v2096 = vadd.f32 %v2058, %v2076
          %v2097 = vadd.f32 %v2059, %v2076
          %v2098 = vadd.f32 %v2060, %v2076
          %v2099 = vadd.f32 %v2061, %v2076
          %v2100 = vadd.f32 %v2062, %v2076
          %v2101 = vadd.f32 %v2063, %v2076
          %v2102 = vadd.f32 %v2064, %v2076
          %v2103 = vadd.f32 %v2065, %v2076
          %v2104 = vadd.f32 %v2066, %v2076
          %v2105 = vadd.f32 %v2067, %v2076
          %v2106 = vadd.f32 %v2068, %v2076
          %v2107 = vadd.f32 %v2069, %v2076
          %v2108 = vadd.f32 %v2070, %v2076
          %v2109 = vadd.f32 %v2071, %v2076
          %v2110 = vmax.f32 %v2078, 0.0
          %v2111 = vmax.f32 %v2079, 0.0
          %v2112 = vmax.f32 %v2080, 0.0
          %v2113 = vmax.f32 %v2081, 0.0
          %v2114 = vmax.f32 %v2082, 0.0
          %v2115 = vmax.f32 %v2083, 0.0
          %v2116 = vmax.f32 %v2084, 0.0
          %v2117 = vmax.f32 %v2085, 0.0
          %v2118 = vmax.f32 %v2086, 0.0
          %v2119 = vmax.f32 %v2087, 0.0
          %v2120 = vmax.f32 %v2088, 0.0
          %v2121 = vmax.f32 %v2089, 0.0
          %v2122 = vmax.f32 %v2090, 0.0
          %v2123 = vmax.f32 %v2091, 0.0
          %v2124 = vmax.f32 %v2092, 0.0
          %v2125 = vmax.f32 %v2093, 0.0
          %v2126 = vmax.f32 %v2094, 0.0
          %v2127 = vmax.f32 %v2095, 0.0
          %v2128 = vmax.f32 %v2096, 0.0
          %v2129 = vmax.f32 %v2097, 0.0
          %v2130 = vmax.f32 %v2098, 0.0
          %v2131 = vmax.f32 %v2099, 0.0
          %v2132 = vmax.f32 %v2100, 0.0
          %v2133 = vmax.f32 %v2101, 0.0
          %v2134 = vmax.f32 %v2102, 0.0
          %v2135 = vmax.f32 %v2103, 0.0
          %v2136 = vmax.f32 %v2104, 0.0
          %v2137 = vmax.f32 %v2105, 0.0
          %v2138 = vmax.f32 %v2106, 0.0
          %v2139 = vmax.f32 %v2107, 0.0
          %v2140 = vmax.f32 %v2108, 0.0
          %v2141 = vmax.f32 %v2109, 0.0
          %v2142 = vmax.f32 %v2110, %v2118
          %v2143 = vmax.f32 %v2111, %v2119
          %v2144 = vmax.f32 %v2112, %v2120
          %v2145 = vmax.f32 %v2113, %v2121
          %v2146 = vmax.f32 %v2114, %v2122
          %v2147 = vmax.f32 %v2115, %v2123
          %v2148 = vmax.f32 %v2116, %v2124
          %v2149 = vmax.f32 %v2117, %v2125
          %v2150 = vmax.f32 %v2126, %v2134
          %v2151 = vmax.f32 %v2127, %v2135
          %v2152 = vmax.f32 %v2128, %v2136
          %v2153 = vmax.f32 %v2129, %v2137
          %v2154 = vmax.f32 %v2130, %v2138
          %v2155 = vmax.f32 %v2131, %v2139
          %v2156 = vmax.f32 %v2132, %v2140
          %v2157 = vmax.f32 %v2133, %v2141
          %v2158 = vmax.f32 %v2142, %v2150
          %v2159 = vmax.f32 %v2143, %v2151
          %v2160 = vmax.f32 %v2144, %v2152
          %v2161 = vmax.f32 %v2145, %v2153
          %v2162 = vmax.f32 %v2146, %v2154
          %v2163 = vmax.f32 %v2147, %v2155
          %v2164 = vmax.f32 %v2148, %v2156
          %v2165 = vmax.f32 %v2149, %v2157
          %v2166 = vld [vmem:[%s5] sm:$0xff]
          %v2167 = vld [vmem:[%s5 + $0x8] sm:$0xff]
          %v2168 = vld [vmem:[%s5 + $0x10] sm:$0xff]
          %v2169 = vld [vmem:[%s5 + $0x18] sm:$0xff]
          %v2170 = vld [vmem:[%s5 + $0x20] sm:$0xff]
          %v2171 = vld [vmem:[%s5 + $0x28] sm:$0xff]
          %v2172 = vld [vmem:[%s5 + $0x30] sm:$0xff]
          %v2173 = vld [vmem:[%s5 + $0x38] sm:$0xff]
          %2175 = vset.pattern.permute.xlu0 0
          %2176 = vperm.xlu0 %2175, %v2158
          %v2177 = vpop.permute.xlu0 %2176
          %2180 = vset.pattern.permute.xlu0 0
          %2181 = vperm.xlu0 %2180, %v2159
          %v2182 = vpop.permute.xlu0 %2181
          %2185 = vset.pattern.permute.xlu0 0
          %2186 = vperm.xlu0 %2185, %v2160
          %v2187 = vpop.permute.xlu0 %2186
          %2190 = vset.pattern.permute.xlu0 0
          %2191 = vperm.xlu0 %2190, %v2161
          %v2192 = vpop.permute.xlu0 %2191
          %2195 = vset.pattern.permute.xlu0 0
          %2196 = vperm.xlu0 %2195, %v2162
          %v2197 = vpop.permute.xlu0 %2196
          %2200 = vset.pattern.permute.xlu0 0
          %2201 = vperm.xlu0 %2200, %v2163
          %v2202 = vpop.permute.xlu0 %2201
          %2205 = vset.pattern.permute.xlu0 0
          %2206 = vperm.xlu0 %2205, %v2164
          %v2207 = vpop.permute.xlu0 %2206
          %2210 = vset.pattern.permute.xlu0 0
          %2211 = vperm.xlu0 %2210, %v2165
          %v2212 = vpop.permute.xlu0 %2211
          %v2214 = vmul.f32 %v2177, %v2166
          %v2215 = vmul.f32 %v2182, %v2167
          %v2216 = vmul.f32 %v2187, %v2168
          %v2217 = vmul.f32 %v2192, %v2169
          %v2218 = vmul.f32 %v2197, %v2170
          %v2219 = vmul.f32 %v2202, %v2171
          %v2220 = vmul.f32 %v2207, %v2172
          %v2221 = vmul.f32 %v2212, %v2173
          %s2222 = scalar_lea.vmem %s5, 64
          %v2223 = vld [vmem:[%s2222] sm:$0xff]
          %v2224 = vld [vmem:[%s2222 + $0x8] sm:$0xff]
          %v2225 = vld [vmem:[%s2222 + $0x10] sm:$0xff]
          %v2226 = vld [vmem:[%s2222 + $0x18] sm:$0xff]
          %v2227 = vld [vmem:[%s2222 + $0x20] sm:$0xff]
          %v2228 = vld [vmem:[%s2222 + $0x28] sm:$0xff]
          %v2229 = vld [vmem:[%s2222 + $0x30] sm:$0xff]
          %v2230 = vld [vmem:[%s2222 + $0x38] sm:$0xff]
          %2231 = vset.pattern.permute.xlu0 1
          %2232 = vperm.xlu0 %2231, %v2158
          %v2233 = vpop.permute.xlu0 %2232
          %2235 = vset.pattern.permute.xlu0 1
          %2236 = vperm.xlu0 %2235, %v2159
          %v2237 = vpop.permute.xlu0 %2236
          %2239 = vset.pattern.permute.xlu0 1
          %2240 = vperm.xlu0 %2239, %v2160
          %v2241 = vpop.permute.xlu0 %2240
          %2243 = vset.pattern.permute.xlu0 1
          %2244 = vperm.xlu0 %2243, %v2161
          %v2245 = vpop.permute.xlu0 %2244
          %2247 = vset.pattern.permute.xlu0 1
          %2248 = vperm.xlu0 %2247, %v2162
          %v2249 = vpop.permute.xlu0 %2248
          %2251 = vset.pattern.permute.xlu0 1
          %2252 = vperm.xlu0 %2251, %v2163
          %v2253 = vpop.permute.xlu0 %2252
          %2255 = vset.pattern.permute.xlu0 1
          %2256 = vperm.xlu0 %2255, %v2164
          %v2257 = vpop.permute.xlu0 %2256
          %2259 = vset.pattern.permute.xlu0 1
          %2260 = vperm.xlu0 %2259, %v2165
          %v2261 = vpop.permute.xlu0 %2260
          %v2263 = vmul.f32 %v2233, %v2223
          %v2264 = vmul.f32 %v2237, %v2224
          %v2265 = vmul.f32 %v2241, %v2225
          %v2266 = vmul.f32 %v2245, %v2226
          %v2267 = vmul.f32 %v2249, %v2227
          %v2268 = vmul.f32 %v2253, %v2228
          %v2269 = vmul.f32 %v2257, %v2229
          %v2270 = vmul.f32 %v2261, %v2230
          %v2271 = vadd.f32 %v2214, %v2263
          %v2272 = vadd.f32 %v2215, %v2264
          %v2273 = vadd.f32 %v2216, %v2265
          %v2274 = vadd.f32 %v2217, %v2266
          %v2275 = vadd.f32 %v2218, %v2267
          %v2276 = vadd.f32 %v2219, %v2268
          %v2277 = vadd.f32 %v2220, %v2269
          %v2278 = vadd.f32 %v2221, %v2270
          %s2279 = scalar_lea.vmem %s5, 128
          %v2280 = vld [vmem:[%s2279] sm:$0xff]
          %v2281 = vld [vmem:[%s2279 + $0x8] sm:$0xff]
          %v2282 = vld [vmem:[%s2279 + $0x10] sm:$0xff]
          %v2283 = vld [vmem:[%s2279 + $0x18] sm:$0xff]
          %v2284 = vld [vmem:[%s2279 + $0x20] sm:$0xff]
          %v2285 = vld [vmem:[%s2279 + $0x28] sm:$0xff]
          %v2286 = vld [vmem:[%s2279 + $0x30] sm:$0xff]
          %v2287 = vld [vmem:[%s2279 + $0x38] sm:$0xff]
          %2288 = vset.pattern.permute.xlu0 2
          %2289 = vperm.xlu0 %2288, %v2158
          %v2290 = vpop.permute.xlu0 %2289
          %2292 = vset.pattern.permute.xlu0 2
          %2293 = vperm.xlu0 %2292, %v2159
          %v2294 = vpop.permute.xlu0 %2293
          %2296 = vset.pattern.permute.xlu0 2
          %2297 = vperm.xlu0 %2296, %v2160
          %v2298 = vpop.permute.xlu0 %2297
          %2300 = vset.pattern.permute.xlu0 2
          %2301 = vperm.xlu0 %2300, %v2161
          %v2302 = vpop.permute.xlu0 %2301
          %2304 = vset.pattern.permute.xlu0 2
          %2305 = vperm.xlu0 %2304, %v2162
          %v2306 = vpop.permute.xlu0 %2305
          %2308 = vset.pattern.permute.xlu0 2
          %2309 = vperm.xlu0 %2308, %v2163
          %v2310 = vpop.permute.xlu0 %2309
          %2312 = vset.pattern.permute.xlu0 2
          %2313 = vperm.xlu0 %2312, %v2164
          %v2314 = vpop.permute.xlu0 %2313
          %2316 = vset.pattern.permute.xlu0 2
          %2317 = vperm.xlu0 %2316, %v2165
          %v2318 = vpop.permute.xlu0 %2317
          %v2320 = vmul.f32 %v2290, %v2280
          %v2321 = vmul.f32 %v2294, %v2281
          %v2322 = vmul.f32 %v2298, %v2282
          %v2323 = vmul.f32 %v2302, %v2283
          %v2324 = vmul.f32 %v2306, %v2284
          %v2325 = vmul.f32 %v2310, %v2285
          %v2326 = vmul.f32 %v2314, %v2286
          %v2327 = vmul.f32 %v2318, %v2287
          %v2328 = vadd.f32 %v2271, %v2320
          %v2329 = vadd.f32 %v2272, %v2321
          %v2330 = vadd.f32 %v2273, %v2322
          %v2331 = vadd.f32 %v2274, %v2323
          %v2332 = vadd.f32 %v2275, %v2324
          %v2333 = vadd.f32 %v2276, %v2325
          %v2334 = vadd.f32 %v2277, %v2326
          %v2335 = vadd.f32 %v2278, %v2327
          %s2336 = scalar_lea.vmem %s5, 192
          %v2337 = vld [vmem:[%s2336] sm:$0xff]
          %v2338 = vld [vmem:[%s2336 + $0x8] sm:$0xff]
          %v2339 = vld [vmem:[%s2336 + $0x10] sm:$0xff]
          %v2340 = vld [vmem:[%s2336 + $0x18] sm:$0xff]
          %v2341 = vld [vmem:[%s2336 + $0x20] sm:$0xff]
          %v2342 = vld [vmem:[%s2336 + $0x28] sm:$0xff]
          %v2343 = vld [vmem:[%s2336 + $0x30] sm:$0xff]
          %v2344 = vld [vmem:[%s2336 + $0x38] sm:$0xff]
          %2345 = vset.pattern.permute.xlu0 3
          %2346 = vperm.xlu0 %2345, %v2158
          %v2347 = vpop.permute.xlu0 %2346
          %2349 = vset.pattern.permute.xlu0 3
          %2350 = vperm.xlu0 %2349, %v2159
          %v2351 = vpop.permute.xlu0 %2350
          %2353 = vset.pattern.permute.xlu0 3
          %2354 = vperm.xlu0 %2353, %v2160
          %v2355 = vpop.permute.xlu0 %2354
          %2357 = vset.pattern.permute.xlu0 3
          %2358 = vperm.xlu0 %2357, %v2161
          %v2359 = vpop.permute.xlu0 %2358
          %2361 = vset.pattern.permute.xlu0 3
          %2362 = vperm.xlu0 %2361, %v2162
          %v2363 = vpop.permute.xlu0 %2362
          %2365 = vset.pattern.permute.xlu0 3
          %2366 = vperm.xlu0 %2365, %v2163
          %v2367 = vpop.permute.xlu0 %2366
          %2369 = vset.pattern.permute.xlu0 3
          %2370 = vperm.xlu0 %2369, %v2164
          %v2371 = vpop.permute.xlu0 %2370
          %2373 = vset.pattern.permute.xlu0 3
          %2374 = vperm.xlu0 %2373, %v2165
          %v2375 = vpop.permute.xlu0 %2374
          %v2377 = vmul.f32 %v2347, %v2337
          %v2378 = vmul.f32 %v2351, %v2338
          %v2379 = vmul.f32 %v2355, %v2339
          %v2380 = vmul.f32 %v2359, %v2340
          %v2381 = vmul.f32 %v2363, %v2341
          %v2382 = vmul.f32 %v2367, %v2342
          %v2383 = vmul.f32 %v2371, %v2343
          %v2384 = vmul.f32 %v2375, %v2344
          %v2385 = vadd.f32 %v2328, %v2377
          %v2386 = vadd.f32 %v2329, %v2378
          %v2387 = vadd.f32 %v2330, %v2379
          %v2388 = vadd.f32 %v2331, %v2380
          %v2389 = vadd.f32 %v2332, %v2381
          %v2390 = vadd.f32 %v2333, %v2382
          %v2391 = vadd.f32 %v2334, %v2383
          %v2392 = vadd.f32 %v2335, %v2384
          %s2393 = scalar_lea.vmem %s5, 256
          %v2394 = vld [vmem:[%s2393] sm:$0xff]
          %v2395 = vld [vmem:[%s2393 + $0x8] sm:$0xff]
          %v2396 = vld [vmem:[%s2393 + $0x10] sm:$0xff]
          %v2397 = vld [vmem:[%s2393 + $0x18] sm:$0xff]
          %v2398 = vld [vmem:[%s2393 + $0x20] sm:$0xff]
          %v2399 = vld [vmem:[%s2393 + $0x28] sm:$0xff]
          %v2400 = vld [vmem:[%s2393 + $0x30] sm:$0xff]
          %v2401 = vld [vmem:[%s2393 + $0x38] sm:$0xff]
          %2402 = vset.pattern.permute.xlu0 4
          %2403 = vperm.xlu0 %2402, %v2158
          %v2404 = vpop.permute.xlu0 %2403
          %2406 = vset.pattern.permute.xlu0 4
          %2407 = vperm.xlu0 %2406, %v2159
          %v2408 = vpop.permute.xlu0 %2407
          %2410 = vset.pattern.permute.xlu0 4
          %2411 = vperm.xlu0 %2410, %v2160
          %v2412 = vpop.permute.xlu0 %2411
          %2414 = vset.pattern.permute.xlu0 4
          %2415 = vperm.xlu0 %2414, %v2161
          %v2416 = vpop.permute.xlu0 %2415
          %2418 = vset.pattern.permute.xlu0 4
          %2419 = vperm.xlu0 %2418, %v2162
          %v2420 = vpop.permute.xlu0 %2419
          %2422 = vset.pattern.permute.xlu0 4
          %2423 = vperm.xlu0 %2422, %v2163
          %v2424 = vpop.permute.xlu0 %2423
          %2426 = vset.pattern.permute.xlu0 4
          %2427 = vperm.xlu0 %2426, %v2164
          %v2428 = vpop.permute.xlu0 %2427
          %2430 = vset.pattern.permute.xlu0 4
          %2431 = vperm.xlu0 %2430, %v2165
          %v2432 = vpop.permute.xlu0 %2431
          %v2434 = vmul.f32 %v2404, %v2394
          %v2435 = vmul.f32 %v2408, %v2395
          %v2436 = vmul.f32 %v2412, %v2396
          %v2437 = vmul.f32 %v2416, %v2397
          %v2438 = vmul.f32 %v2420, %v2398
          %v2439 = vmul.f32 %v2424, %v2399
          %v2440 = vmul.f32 %v2428, %v2400
          %v2441 = vmul.f32 %v2432, %v2401
          %v2442 = vadd.f32 %v2385, %v2434
          %v2443 = vadd.f32 %v2386, %v2435
          %v2444 = vadd.f32 %v2387, %v2436
          %v2445 = vadd.f32 %v2388, %v2437
          %v2446 = vadd.f32 %v2389, %v2438
          %v2447 = vadd.f32 %v2390, %v2439
          %v2448 = vadd.f32 %v2391, %v2440
          %v2449 = vadd.f32 %v2392, %v2441
          %s2450 = scalar_lea.vmem %s5, 320
          %v2451 = vld [vmem:[%s2450] sm:$0xff]
          %v2452 = vld [vmem:[%s2450 + $0x8] sm:$0xff]
          %v2453 = vld [vmem:[%s2450 + $0x10] sm:$0xff]
          %v2454 = vld [vmem:[%s2450 + $0x18] sm:$0xff]
          %v2455 = vld [vmem:[%s2450 + $0x20] sm:$0xff]
          %v2456 = vld [vmem:[%s2450 + $0x28] sm:$0xff]
          %v2457 = vld [vmem:[%s2450 + $0x30] sm:$0xff]
          %v2458 = vld [vmem:[%s2450 + $0x38] sm:$0xff]
          %2459 = vset.pattern.permute.xlu0 5
          %2460 = vperm.xlu0 %2459, %v2158
          %v2461 = vpop.permute.xlu0 %2460
          %2463 = vset.pattern.permute.xlu0 5
          %2464 = vperm.xlu0 %2463, %v2159
          %v2465 = vpop.permute.xlu0 %2464
          %2467 = vset.pattern.permute.xlu0 5
          %2468 = vperm.xlu0 %2467, %v2160
          %v2469 = vpop.permute.xlu0 %2468
          %2471 = vset.pattern.permute.xlu0 5
          %2472 = vperm.xlu0 %2471, %v2161
          %v2473 = vpop.permute.xlu0 %2472
          %2475 = vset.pattern.permute.xlu0 5
          %2476 = vperm.xlu0 %2475, %v2162
          %v2477 = vpop.permute.xlu0 %2476
          %2479 = vset.pattern.permute.xlu0 5
          %2480 = vperm.xlu0 %2479, %v2163
          %v2481 = vpop.permute.xlu0 %2480
          %2483 = vset.pattern.permute.xlu0 5
          %2484 = vperm.xlu0 %2483, %v2164
          %v2485 = vpop.permute.xlu0 %2484
          %2487 = vset.pattern.permute.xlu0 5
          %2488 = vperm.xlu0 %2487, %v2165
          %v2489 = vpop.permute.xlu0 %2488
          %v2491 = vmul.f32 %v2461, %v2451
          %v2492 = vmul.f32 %v2465, %v2452
          %v2493 = vmul.f32 %v2469, %v2453
          %v2494 = vmul.f32 %v2473, %v2454
          %v2495 = vmul.f32 %v2477, %v2455
          %v2496 = vmul.f32 %v2481, %v2456
          %v2497 = vmul.f32 %v2485, %v2457
          %v2498 = vmul.f32 %v2489, %v2458
          %v2499 = vadd.f32 %v2442, %v2491
          %v2500 = vadd.f32 %v2443, %v2492
          %v2501 = vadd.f32 %v2444, %v2493
          %v2502 = vadd.f32 %v2445, %v2494
          %v2503 = vadd.f32 %v2446, %v2495
          %v2504 = vadd.f32 %v2447, %v2496
          %v2505 = vadd.f32 %v2448, %v2497
          %v2506 = vadd.f32 %v2449, %v2498
          %s2507 = scalar_lea.vmem %s5, 384
          %v2508 = vld [vmem:[%s2507] sm:$0xff]
          %v2509 = vld [vmem:[%s2507 + $0x8] sm:$0xff]
          %v2510 = vld [vmem:[%s2507 + $0x10] sm:$0xff]
          %v2511 = vld [vmem:[%s2507 + $0x18] sm:$0xff]
          %v2512 = vld [vmem:[%s2507 + $0x20] sm:$0xff]
          %v2513 = vld [vmem:[%s2507 + $0x28] sm:$0xff]
          %v2514 = vld [vmem:[%s2507 + $0x30] sm:$0xff]
          %v2515 = vld [vmem:[%s2507 + $0x38] sm:$0xff]
          %2516 = vset.pattern.permute.xlu0 6
          %2517 = vperm.xlu0 %2516, %v2158
          %v2518 = vpop.permute.xlu0 %2517
          %2520 = vset.pattern.permute.xlu0 6
          %2521 = vperm.xlu0 %2520, %v2159
          %v2522 = vpop.permute.xlu0 %2521
          %2524 = vset.pattern.permute.xlu0 6
          %2525 = vperm.xlu0 %2524, %v2160
          %v2526 = vpop.permute.xlu0 %2525
          %2528 = vset.pattern.permute.xlu0 6
          %2529 = vperm.xlu0 %2528, %v2161
          %v2530 = vpop.permute.xlu0 %2529
          %2532 = vset.pattern.permute.xlu0 6
          %2533 = vperm.xlu0 %2532, %v2162
          %v2534 = vpop.permute.xlu0 %2533
          %2536 = vset.pattern.permute.xlu0 6
          %2537 = vperm.xlu0 %2536, %v2163
          %v2538 = vpop.permute.xlu0 %2537
          %2540 = vset.pattern.permute.xlu0 6
          %2541 = vperm.xlu0 %2540, %v2164
          %v2542 = vpop.permute.xlu0 %2541
          %2544 = vset.pattern.permute.xlu0 6
          %2545 = vperm.xlu0 %2544, %v2165
          %v2546 = vpop.permute.xlu0 %2545
          %v2548 = vmul.f32 %v2518, %v2508
          %v2549 = vmul.f32 %v2522, %v2509
          %v2550 = vmul.f32 %v2526, %v2510
          %v2551 = vmul.f32 %v2530, %v2511
          %v2552 = vmul.f32 %v2534, %v2512
          %v2553 = vmul.f32 %v2538, %v2513
          %v2554 = vmul.f32 %v2542, %v2514
          %v2555 = vmul.f32 %v2546, %v2515
          %v2556 = vadd.f32 %v2499, %v2548
          %v2557 = vadd.f32 %v2500, %v2549
          %v2558 = vadd.f32 %v2501, %v2550
          %v2559 = vadd.f32 %v2502, %v2551
          %v2560 = vadd.f32 %v2503, %v2552
          %v2561 = vadd.f32 %v2504, %v2553
          %v2562 = vadd.f32 %v2505, %v2554
          %v2563 = vadd.f32 %v2506, %v2555
          %s2564 = scalar_lea.vmem %s5, 448
          %v2565 = vld [vmem:[%s2564] sm:$0xff]
          %v2566 = vld [vmem:[%s2564 + $0x8] sm:$0xff]
          %v2567 = vld [vmem:[%s2564 + $0x10] sm:$0xff]
          %v2568 = vld [vmem:[%s2564 + $0x18] sm:$0xff]
          %v2569 = vld [vmem:[%s2564 + $0x20] sm:$0xff]
          %v2570 = vld [vmem:[%s2564 + $0x28] sm:$0xff]
          %v2571 = vld [vmem:[%s2564 + $0x30] sm:$0xff]
          %v2572 = vld [vmem:[%s2564 + $0x38] sm:$0xff]
          %2573 = vset.pattern.permute.xlu0 7
          %2574 = vperm.xlu0 %2573, %v2158
          %v2575 = vpop.permute.xlu0 %2574
          %2577 = vset.pattern.permute.xlu0 7
          %2578 = vperm.xlu0 %2577, %v2159
          %v2579 = vpop.permute.xlu0 %2578
          %2581 = vset.pattern.permute.xlu0 7
          %2582 = vperm.xlu0 %2581, %v2160
          %v2583 = vpop.permute.xlu0 %2582
          %2585 = vset.pattern.permute.xlu0 7
          %2586 = vperm.xlu0 %2585, %v2161
          %v2587 = vpop.permute.xlu0 %2586
          %2589 = vset.pattern.permute.xlu0 7
          %2590 = vperm.xlu0 %2589, %v2162
          %v2591 = vpop.permute.xlu0 %2590
          %2593 = vset.pattern.permute.xlu0 7
          %2594 = vperm.xlu0 %2593, %v2163
          %v2595 = vpop.permute.xlu0 %2594
          %2597 = vset.pattern.permute.xlu0 7
          %2598 = vperm.xlu0 %2597, %v2164
          %v2599 = vpop.permute.xlu0 %2598
          %2601 = vset.pattern.permute.xlu0 7
          %2602 = vperm.xlu0 %2601, %v2165
          %v2603 = vpop.permute.xlu0 %2602
          %v2605 = vmul.f32 %v2575, %v2565
          %v2606 = vmul.f32 %v2579, %v2566
          %v2607 = vmul.f32 %v2583, %v2567
          %v2608 = vmul.f32 %v2587, %v2568
          %v2609 = vmul.f32 %v2591, %v2569
          %v2610 = vmul.f32 %v2595, %v2570
          %v2611 = vmul.f32 %v2599, %v2571
          %v2612 = vmul.f32 %v2603, %v2572
          %v2613 = vadd.f32 %v2556, %v2605
          %v2614 = vadd.f32 %v2557, %v2606
          %v2615 = vadd.f32 %v2558, %v2607
          %v2616 = vadd.f32 %v2559, %v2608
          %v2617 = vadd.f32 %v2560, %v2609
          %v2618 = vadd.f32 %v2561, %v2610
          %v2619 = vadd.f32 %v2562, %v2611
          %v2620 = vadd.f32 %v2563, %v2612
          %vm2621 = vcmask 64512
          %v2622 = vsel %vm2621, %v2613, 0.0
          %v2623 = vsel %vm2621, %v2614, 0.0
          %v2624 = vadd.f32 %v2622, %v2623
          %v2625 = vsel %vm2621, %v2615, 0.0
          %v2626 = vadd.f32 %v2624, %v2625
          %v2627 = vsel %vm2621, %v2616, 0.0
          %v2628 = vadd.f32 %v2626, %v2627
          %v2629 = vsel %vm2621, %v2617, 0.0
          %v2630 = vadd.f32 %v2628, %v2629
          %v2631 = vsel %vm2621, %v2618, 0.0
          %v2632 = vadd.f32 %v2630, %v2631
          %v2633 = vsel %vm2621, %v2619, 0.0
          %v2634 = vadd.f32 %v2632, %v2633
          %v2635 = vsel %vm2621, %v2620, 0.0
          %v2636 = vadd.f32 %v2634, %v2635
          %v2637 = vrot.slane %v2636, 4
          %v2638 = vadd.f32 %v2636, %v2637
          %v2639 = vrot.slane %v2638, 2
          %v2640 = vadd.f32 %v2638, %v2639
          %v2641 = vrot.slane %v2640, 1
          %v2642 = vadd.f32 %v2640, %v2641
          %v2643 = vld [vmem:[%s6] sm:$0x1]
          %v2644 = vadd.f32 %v2642, %v2643
          %s2645 = scalar_lea.vmem [#allocation4], %s24
          %vm2646 = vcmask 57344
          %2647 = vst.msk [vmem:[%s2645] sm:$0x1] %vm2646, %v2644
        $region60: #{student_net5_forward.1} parent=47 // pred_fallthru
          _
        // Predicated region
        $region61: #{student_net5_forward.1} parent=47 // pred_check
          %p2648 = pneg %p196
        $region62: #{student_net5_forward.1} parent=47 // pred_check_branch
          %2650 = sbr.rel (%p2648) target = $region64
        $region63: #{student_net5_forward.1} parent=47 // pred_region
          %s2652 = ssub.s32 32, 32
          %2653 = vsyncadd [#allocation5], %s2652
          %s2655 = sshll.u32 [#allocation4], 4
          %s2656 = int_to_ptr.vmem [resolvable:$true] %s2655
          %2658 = dma.vmem_to_hbm [thread:$0]  %s2656, 32, %s7, [#allocation5]
        $region64: #{student_net5_forward.1} parent=47 // pred_fallthru
          _
        // Predicated region
        $region65: #{student_net5_forward.1} parent=47 // pred_check
          %p2659 = pneg %p196
        $region66: #{student_net5_forward.1} parent=47 // pred_check_branch
          %2661 = sbr.rel (%p2659) target = $region68
        $region67: #{student_net5_forward.1} parent=47 // pred_region
          %2662 = dma.done [#allocation5], 32
        $region68: #{student_net5_forward.1} parent=47 // pred_fallthru
          _
      $region48: #{student_net5_forward.1} parent=5 // pred_fallthru
        _
      %p2663 = scmp.le.s32.totalorder 2, %s14
      // Predicated region
      $region69: #{student_net5_forward.1} parent=5 // pred_check
        %p2664 = pneg %p2663
      $region70: #{student_net5_forward.1} parent=5 // pred_check_branch
        %2666 = sbr.rel (%p2664) target = $region72
      $region71: #{student_net5_forward.1} parent=5 // pred_region
        %s2667 = ssub.s32 %s14, 2
      $region72: #{student_net5_forward.1} parent=5 // pred_fallthru
        _
    $region6: #{student_net5_forward.1} parent=1 // loop_footer
      %s18 = sadd.s32 1, %s14
    $region7: #{student_net5_forward.1} parent=1 // loop_footer_branch
      %13 = sbr.rel target = $region3
    $region8: #{student_net5_forward.1} parent=1 // loop_exit
      _
    %2668 = vsyncpa [#allocation5], 1
    %s2669 = scalar_lea.sflag [#allocation5], 1
    %2670 = vsyncpa %s2669, 1

</llo_original>
